<compile_context>
chip_gen: v5e
topology: v5e:2x2
jax: 0.10.0
libtpu: 0.0.40
codegen_flags: <defaults>
</compile_context>

<pallas_src>
import jax
import jax.numpy as jnp
from jax import lax
from jax.experimental import pallas as pl
from jax.experimental.pallas import tpu as pltpu

EPS = 1e-5
HIDDEN = 128      # model hidden width (fixed by the PyTorch module)
O_HID_PAD = 128   # output-layer hidden dim 64 padded to a full lane width
C_PAD = 128       # lane-dense padded class dimension for the final store


def _round_up(a, m):
    return (a + m - 1) // m * m


def prepare_params(w_in, b_in, g_in, be_in, blocks, w_o1, b_o1, w_o2, b_o2,
                   *, matmul_dtype=jnp.bfloat16):
    """One-time conversion of PyTorch-layout params to kernel layout.

    blocks: list of (w1, g1, be1, w2, g2, be2) per residual block
            (residual-block Linear biases are omitted -- dead under train-mode BN).
    Matmul weights are stored in `matmul_dtype` (bf16 by default: MXU-native, half the
    VMEM/vld traffic); biases / gamma / beta stay f32.
    """
    f32 = lambda a: jnp.asarray(a, jnp.float32)
    mm = lambda a: f32(a).astype(matmul_dtype)
    row = lambda v: f32(v).reshape(1, -1)

    num_classes, o_hid = w_o2.shape
    # output layer padded to lane-dense 128s (exact: padded features are 0 -> relu -> * 0)
    w_o1_p = jnp.zeros((O_HID_PAD, w_o1.shape[1]), jnp.float32).at[:o_hid].set(f32(w_o1))
    b_o1_p = jnp.zeros((1, O_HID_PAD), jnp.float32).at[0, :o_hid].set(f32(b_o1))
    w_o2_p = jnp.zeros((C_PAD, O_HID_PAD), jnp.float32).at[:num_classes, :o_hid].set(f32(w_o2))
    b_o2_p = jnp.zeros((1, C_PAD), jnp.float32).at[0, :num_classes].set(f32(b_o2))

    return (
        mm(f32(w_in).T), row(b_in), row(g_in), row(be_in),
        jnp.stack([mm(f32(b[0]).T) for b in blocks]),   # (depth, 128, 128)
        jnp.stack([row(b[1]) for b in blocks]),          # (depth, 1, 128)
        jnp.stack([row(b[2]) for b in blocks]),
        jnp.stack([mm(f32(b[3]).T) for b in blocks]),
        jnp.stack([row(b[4]) for b in blocks]),
        jnp.stack([row(b[5]) for b in blocks]),
        mm(w_o1_p.T), b_o1_p,                            # (128, 128), (1, 128)
        mm(w_o2_p.T), b_o2_p,                            # (128, 128), (1, 128)
    )


def resnet1d_forward(x, kparams, num_classes, *, block_rows=512):
    """Fused forward. x: (N, input_dim). Returns f32 logits (N, num_classes)."""
    assert block_rows % 8 == 0 and block_rows > 0
    N, in_dim = x.shape
    x = jnp.asarray(x, jnp.float32)
    depth = int(kparams[4].shape[0])
    mm_dtype = kparams[0].dtype

    # batch padding / tiling: TM-row tiles, N padded to a multiple of TM (and of 8)
    TM = _round_up(N, 8) if N <= block_rows else block_rows
    N_pad = _round_up(N, TM)
    num_tiles = N_pad // TM
    has_pad = N_pad > N
    if has_pad:
        x = jnp.pad(x, ((0, N_pad - N), (0, 0)))
    inv_n = 1.0 / float(N)

    def kernel(x_ref, w_in_ref, b_in_ref, g_in_ref, be_in_ref,
               w1s_ref, g1s_ref, be1s_ref, w2s_ref, g2s_ref, be2s_ref,
               w_o1_ref, b_o1_ref, w_o2_ref, b_o2_ref,
               o_ref, h_scr, ssum_ref, ssq_ref):
        i = pl.program_id(0)

        def matmul(a, w):
            # bf16 (or f32) MXU operands, f32 accumulation
            return jnp.dot(a.astype(mm_dtype), w, preferred_element_type=jnp.float32)

        @pl.when(i == 0)
        def _():
            ssum_ref[...] = jnp.zeros_like(ssum_ref)
            ssq_ref[...] = jnp.zeros_like(ssq_ref)

        # ---- stage 1 (every batch tile): input Linear(+bias) -> ReLU; BN stats; stash ----
        h = jnp.maximum(matmul(x_ref[...], w_in_ref[...]) + b_in_ref[...], 0.0)
        if has_pad:
            rows = i * TM + lax.broadcasted_iota(jnp.int32, (TM, 1), 0)
            h = h * (rows < N).astype(jnp.float32)        # keep padded rows out of the stats
        ssum_ref[...] += jnp.sum(h, axis=0, keepdims=True)
        ssq_ref[...] += jnp.sum(h * h, axis=0, keepdims=True)
        start = pl.multiple_of(i * TM, TM)
        h_scr[pl.ds(start, TM), :] = h

        # ---- stage 2 (last tile): finalize input BN, residual blocks, output layer ----
        @pl.when(i == num_tiles - 1)
        def _():
            if has_pad:
                rows_all = lax.broadcasted_iota(jnp.int32, (N_pad, 1), 0)
                mask = (rows_all < N).astype(jnp.float32)
            else:
                mask = None

            def bn(t, g, be):
                # train-mode BatchNorm1d, one-pass stats (sum / sumsq), exact batch size N
                tq = t if mask is None else t * mask
                s = jnp.sum(tq, axis=0, keepdims=True)
                sq = jnp.sum(tq * tq, axis=0, keepdims=True)
                m = s * inv_n
                v = jnp.maximum(sq * inv_n - m * m, 0.0)
                scale = g * lax.rsqrt(v + EPS)             # EUP slot -> effectively free
                return t * scale + (be - m * scale)

            # input-layer BN from the accumulated full-batch sum / sumsq
            m0 = ssum_ref[...] * inv_n
            v0 = jnp.maximum(ssq_ref[...] * inv_n - m0 * m0, 0.0)
            scale0 = g_in_ref[...] * lax.rsqrt(v0 + EPS)
            h_scr[...] = h_scr[...] * scale0 + (be_in_ref[...] - m0 * scale0)

            # residual blocks: Linear -> BN -> ReLU -> Linear -> BN; add; ReLU
            # (block Linear biases dropped: exactly cancelled by the BN mean subtraction)
            def res_block(d):
                hb = h_scr[...]
                t = matmul(hb, w1s_ref[d])
                t = jnp.maximum(bn(t, g1s_ref[d], be1s_ref[d]), 0.0)
                t = matmul(t, w2s_ref[d])
                t = bn(t, g2s_ref[d], be2s_ref[d])
                h_scr[...] = jnp.maximum(hb + t, 0.0)

            if depth <= 4:
                for d in range(depth):      # small depth: static unroll for LLO visibility
                    res_block(d)
            else:
                @pl.loop(0, depth)          # larger depth: bound live ranges / code size
                def _(d):
                    res_block(d)

            # output layer: Linear -> ReLU -> Linear (hidden & class dims lane-dense padded)
            hb = h_scr[...]
            t = jnp.maximum(matmul(hb, w_o1_ref[...]) + b_o1_ref[...], 0.0)
            o_ref[...] = (matmul(t, w_o2_ref[...]) + b_o2_ref[...]).astype(o_ref.dtype)

    def const_spec(a):
        # full-array block, constant index map -> DMA'd once, resident across the grid
        return pl.BlockSpec(a.shape, lambda i, _n=a.ndim: (0,) * _n)

    in_specs = [pl.BlockSpec((TM, in_dim), lambda i: (i, 0))]
    in_specs += [const_spec(p) for p in kparams]
    out_spec = pl.BlockSpec((N_pad, C_PAD), lambda i: (0, 0))

    # explicit VMEM budget (v7x has only 64 MiB physical)
    weight_bytes = sum(int(p.size) * p.dtype.itemsize for p in kparams)
    footprint = (2 * TM * in_dim * 4            # streamed x (double-buffered)
                 + 2 * weight_bytes             # resident weights (conservative x2)
                 + 2 * N_pad * C_PAD * 4        # resident output
                 + N_pad * HIDDEN * 4           # full-batch activation scratch
                 + 2 * HIDDEN * 4)              # BN stats scratch
    if footprint > 60 * 1024 * 1024:
        # TODO(synk): for batches whose resident activations overflow VMEM (notably v7x's
        # 64 MiB), stream the residual blocks per batch tile with a two-pass
        # (stats-then-normalize) BatchNorm and a cross-core stats reduction for dual-TC.
        raise ValueError(
            f"batch of {N} rows needs ~{footprint / 2**20:.1f} MiB VMEM; reduce the batch "
            f"per call or implement the streamed two-pass BN path.")
    vmem_limit = int(min(64 * 1024 * 1024, max(32 * 1024 * 1024, footprint + (4 << 20))))

    flops = (2 * N_pad * in_dim * HIDDEN
             + depth * 2 * 2 * N_pad * HIDDEN * HIDDEN
             + 2 * N_pad * HIDDEN * O_HID_PAD
             + 2 * N_pad * O_HID_PAD * C_PAD)
    cost = pl.CostEstimate(
        flops=flops,
        transcendentals=(2 * depth + 1) * HIDDEN,
        bytes_accessed=N_pad * in_dim * 4 + N_pad * C_PAD * 4 + weight_bytes,
    )

    out = pl.pallas_call(
        kernel,
        out_shape=jax.ShapeDtypeStruct((N_pad, C_PAD), jnp.float32),   # explicit f32 logits
        grid_spec=pltpu.PrefetchScalarGridSpec(
            num_scalar_prefetch=0,
            grid=(num_tiles,),
            in_specs=in_specs,
            out_specs=out_spec,
            scratch_shapes=[
                pltpu.VMEM((N_pad, HIDDEN), jnp.float32),   # full-batch activations
                pltpu.VMEM((1, HIDDEN), jnp.float32),       # input-BN sum
                pltpu.VMEM((1, HIDDEN), jnp.float32),       # input-BN sum of squares
            ],
        ),
        compiler_params=pltpu.CompilerParams(
            dimension_semantics=("arbitrary",),
            vmem_limit_bytes=vmem_limit,
        ),
        cost_estimate=cost,
    )(x, *kparams)
    return out[:N, :num_classes]


def resnet1d_ref(x, w_in, b_in, g_in, be_in, blocks_full, w_o1, b_o1, w_o2, b_o2):
    """Plain-JAX f32 reference matching the PyTorch train-mode forward (biases included)."""
    def bn(h, g, be):
        m = jnp.mean(h, axis=0, keepdims=True)
        v = jnp.mean((h - m) ** 2, axis=0, keepdims=True)
        scale = g * lax.rsqrt(v + EPS)
        return h * scale + (be - m * scale)

    h = bn(jnp.maximum(x @ w_in.T + b_in, 0.0), g_in, be_in)
    for (w1, b1, g1, be1, w2, b2, g2, be2) in blocks_full:
        t = jnp.maximum(bn(h @ w1.T + b1, g1, be1), 0.0)
        t = bn(t @ w2.T + b2, g2, be2)
        h = jnp.maximum(h + t, 0.0)
    t = jnp.maximum(h @ w_o1.T + b_o1, 0.0)
    return t @ w_o2.T + b_o2


if __name__ == "__main__":
    N, INPUT_DIM, NUM_CLASSES, DEPTH = 24, 32, 8, 3

    key = jax.random.PRNGKey(0)
    keys = iter(jax.random.split(key, 64))

    def uni(shape, bound):
        return jax.random.uniform(next(keys), shape, jnp.float32, -bound, bound)

    def bn_params(dim):
        g = jax.random.uniform(next(keys), (dim,), jnp.float32, 0.8, 1.2)
        be = jax.random.uniform(next(keys), (dim,), jnp.float32, -0.2, 0.2)
        return g, be

    x = jax.random.normal(next(keys), (N, INPUT_DIM), dtype=jnp.float32)

    # input layer params (nn.Linear default uniform +/- 1/sqrt(fan_in))
    ib = 1.0 / (INPUT_DIM ** 0.5)
    w_in = uni((HIDDEN, INPUT_DIM), ib); b_in = uni((HIDDEN,), ib)
    g_in, be_in = bn_params(HIDDEN)

    # residual block params
    blocks_full = []
    hb = 1.0 / (HIDDEN ** 0.5)
    for _ in range(DEPTH):
        w1 = uni((HIDDEN, HIDDEN), hb); b1 = uni((HIDDEN,), hb)
        g1, be1 = bn_params(HIDDEN)
        w2 = uni((HIDDEN, HIDDEN), hb); b2 = uni((HIDDEN,), hb)
        g2, be2 = bn_params(HIDDEN)
        blocks_full.append((w1, b1, g1, be1, w2, b2, g2, be2))

    # output layer params
    w_o1 = uni((64, HIDDEN), hb); b_o1 = uni((64,), hb)
    ob = 1.0 / (64 ** 0.5)
    w_o2 = uni((NUM_CLASSES, 64), ob); b_o2 = uni((NUM_CLASSES,), ob)

    blocks_nobias = [(w1, g1, be1, w2, g2, be2)
                     for (w1, b1, g1, be1, w2, b2, g2, be2) in blocks_full]

    ref = resnet1d_ref(x, w_in, b_in, g_in, be_in, blocks_full, w_o1, b_o1, w_o2, b_o2)

    # 1) exact-structure check: f32 MXU operands, multi-tile batch grid (+ row padding/mask)
    kp_f32 = prepare_params(w_in, b_in, g_in, be_in, blocks_nobias,
                            w_o1, b_o1, w_o2, b_o2, matmul_dtype=jnp.float32)
    out_f32 = jax.block_until_ready(resnet1d_forward(x, kp_f32, NUM_CLASSES, block_rows=16))
    assert out_f32.shape == (N, NUM_CLASSES)
    err32 = float(jnp.max(jnp.abs(out_f32 - ref)))
    assert jnp.allclose(out_f32, ref, atol=2e-3, rtol=2e-3), (
        "f32 path mismatch vs reference; max abs diff = %e" % err32)

    # 2) perf path: bf16 MXU operands with f32 accumulation (default); looser tolerance
    #    since bf16 operands introduce ~1e-2-level deviations vs the f32 reference.
    kp_bf16 = prepare_params(w_in, b_in, g_in, be_in, blocks_nobias,
                             w_o1, b_o1, w_o2, b_o2)
    out_bf16 = jax.block_until_ready(resnet1d_forward(x, kp_bf16, NUM_CLASSES, block_rows=16))
    err16 = float(jnp.max(jnp.abs(out_bf16 - ref)))
    assert jnp.allclose(out_bf16, ref, atol=1e-1, rtol=1e-1), (
        "bf16 path mismatch vs reference; max abs diff = %e" % err16)

    print("KERNEL_OK")
</pallas_src>

<mosaic_0001>
module attributes {stable_mosaic.version = 11 : i64} {
  func.func @kernel(%arg0: i32, %arg1: memref<16x32xf32, #tpu.memory_space<vmem>>, %arg2: memref<32x128xf32, #tpu.memory_space<vmem>>, %arg3: memref<1x128xf32, #tpu.memory_space<vmem>>, %arg4: memref<1x128xf32, #tpu.memory_space<vmem>>, %arg5: memref<1x128xf32, #tpu.memory_space<vmem>>, %arg6: memref<3x128x128xf32, #tpu.memory_space<vmem>>, %arg7: memref<3x1x128xf32, #tpu.memory_space<vmem>>, %arg8: memref<3x1x128xf32, #tpu.memory_space<vmem>>, %arg9: memref<3x128x128xf32, #tpu.memory_space<vmem>>, %arg10: memref<3x1x128xf32, #tpu.memory_space<vmem>>, %arg11: memref<3x1x128xf32, #tpu.memory_space<vmem>>, %arg12: memref<128x128xf32, #tpu.memory_space<vmem>>, %arg13: memref<1x128xf32, #tpu.memory_space<vmem>>, %arg14: memref<128x128xf32, #tpu.memory_space<vmem>>, %arg15: memref<1x128xf32, #tpu.memory_space<vmem>>, %arg16: memref<32x128xf32, #tpu.memory_space<vmem>>, %arg17: memref<32x128xf32, #tpu.memory_space<vmem>>, %arg18: memref<1x128xf32, #tpu.memory_space<vmem>>, %arg19: memref<1x128xf32, #tpu.memory_space<vmem>>) attributes {dimension_semantics = [#tpu.dimension_semantics<arbitrary>], iteration_bounds = array<i64: 2>, scalar_prefetch = 0 : i64, scratch_operands = 3 : i64, tpu.core_type = #tpu.core_type<tc>, window_params = [{transform_indices = @transform_0, window_bounds = array<i64: 16, 32>}, {pipeline_mode = #tpu.pipeline_mode<synchronous>, transform_indices = @transform_1, window_bounds = array<i64: 32, 128>}, {pipeline_mode = #tpu.pipeline_mode<synchronous>, transform_indices = @transform_2, window_bounds = array<i64: 1, 128>}, {pipeline_mode = #tpu.pipeline_mode<synchronous>, transform_indices = @transform_3, window_bounds = array<i64: 1, 128>}, {pipeline_mode = #tpu.pipeline_mode<synchronous>, transform_indices = @transform_4, window_bounds = array<i64: 1, 128>}, {pipeline_mode = #tpu.pipeline_mode<synchronous>, transform_indices = @transform_5, window_bounds = array<i64: 3, 128, 128>}, {pipeline_mode = #tpu.pipeline_mode<synchronous>, transform_indices = @transform_6, window_bounds = array<i64: 3, 1, 128>}, {pipeline_mode = #tpu.pipeline_mode<synchronous>, transform_indices = @transform_7, window_bounds = array<i64: 3, 1, 128>}, {pipeline_mode = #tpu.pipeline_mode<synchronous>, transform_indices = @transform_8, window_bounds = array<i64: 3, 128, 128>}, {pipeline_mode = #tpu.pipeline_mode<synchronous>, transform_indices = @transform_9, window_bounds = array<i64: 3, 1, 128>}, {pipeline_mode = #tpu.pipeline_mode<synchronous>, transform_indices = @transform_10, window_bounds = array<i64: 3, 1, 128>}, {pipeline_mode = #tpu.pipeline_mode<synchronous>, transform_indices = @transform_11, window_bounds = array<i64: 128, 128>}, {pipeline_mode = #tpu.pipeline_mode<synchronous>, transform_indices = @transform_12, window_bounds = array<i64: 1, 128>}, {pipeline_mode = #tpu.pipeline_mode<synchronous>, transform_indices = @transform_13, window_bounds = array<i64: 128, 128>}, {pipeline_mode = #tpu.pipeline_mode<synchronous>, transform_indices = @transform_14, window_bounds = array<i64: 1, 128>}, {pipeline_mode = #tpu.pipeline_mode<synchronous>, transform_indices = @transform_15, window_bounds = array<i64: 32, 128>}]} {
    %c0_i32 = arith.constant 0 : i32
    %0 = arith.cmpi eq, %arg0, %c0_i32 : i32
    %1 = arith.extui %0 : i1 to i32
    %c0_i32_0 = arith.constant 0 : i32
    %2 = arith.cmpi ne, %1, %c0_i32_0 : i32
    scf.if %2 {
      %cst_20 = arith.constant 0.000000e+00 : f32
      %39 = vector.broadcast %cst_20 : f32 to vector<1x128xf32>
      %c0_21 = arith.constant 0 : index
      %c0_22 = arith.constant 0 : index
      %40 = vector.load %arg18[%c0_21, %c0_22] : memref<1x128xf32, #tpu.memory_space<vmem>>, vector<1x128xf32>
      tpu.vector_store %arg18[%c0_21, %c0_22], %39 {strides = array<i32>} : memref<1x128xf32, #tpu.memory_space<vmem>>, vector<1x128xf32>,
      %cst_23 = arith.constant 0.000000e+00 : f32
      %41 = vector.broadcast %cst_23 : f32 to vector<1x128xf32>
      %c0_24 = arith.constant 0 : index
      %c0_25 = arith.constant 0 : index
      %42 = vector.load %arg19[%c0_24, %c0_25] : memref<1x128xf32, #tpu.memory_space<vmem>>, vector<1x128xf32>
      tpu.vector_store %arg19[%c0_24, %c0_25], %41 {strides = array<i32>} : memref<1x128xf32, #tpu.memory_space<vmem>>, vector<1x128xf32>,
    } else {
    }
    %c0 = arith.constant 0 : index
    %c0_1 = arith.constant 0 : index
    %3 = vector.load %arg1[%c0, %c0_1] : memref<16x32xf32, #tpu.memory_space<vmem>>, vector<16x32xf32>
    %c0_2 = arith.constant 0 : index
    %c0_3 = arith.constant 0 : index
    %4 = vector.load %arg2[%c0_2, %c0_3] : memref<32x128xf32, #tpu.memory_space<vmem>>, vector<32x128xf32>
    %cst = arith.constant dense<0.000000e+00> : vector<16x128xf32>
    %5 = tpu.matmul %3, %4, %cst {dimension_numbers = #tpu.dot_dimension_numbers<[1], [0], [0], [1], [0, 0, 1, 1], [], []>} : vector<16x32xf32>, vector<32x128xf32>, vector<16x128xf32> -> vector<16x128xf32>
    %c0_4 = arith.constant 0 : index
    %c0_5 = arith.constant 0 : index
    %6 = vector.load %arg3[%c0_4, %c0_5] : memref<1x128xf32, #tpu.memory_space<vmem>>, vector<1x128xf32>
    %7 = vector.broadcast %6 : vector<1x128xf32> to vector<16x128xf32>
    %8 = arith.addf %5, %7 : vector<16x128xf32>
    %cst_6 = arith.constant 0.000000e+00 : f32
    %9 = vector.broadcast %cst_6 : f32 to vector<16x128xf32>
    %10 = arith.maximumf %8, %9 : vector<16x128xf32>
    %c16_i32 = arith.constant 16 : i32
    %11 = arith.muli %arg0, %c16_i32 : i32
    %12 = tpu.iota {dimensions = array<i32: 0>} : vector<16x1xi32>
    %13 = vector.broadcast %11 : i32 to vector<16x1xi32>
    %14 = arith.addi %13, %12 : vector<16x1xi32>
    %c24_i32 = arith.constant 24 : i32
    %15 = vector.broadcast %c24_i32 : i32 to vector<16x1xi32>
    %16 = arith.cmpi slt, %14, %15 : vector<16x1xi32>
    %17 = arith.extui %16 : vector<16x1xi1> to vector<16x1xi32>
    %18 = arith.sitofp %17 : vector<16x1xi32> to vector<16x1xf32>
    %19 = vector.broadcast %18 : vector<16x1xf32> to vector<16x128xf32>
    %20 = arith.mulf %10, %19 : vector<16x128xf32>
    %c0_7 = arith.constant 0 : index
    %c0_8 = arith.constant 0 : index
    %21 = vector.load %arg18[%c0_7, %c0_8] : memref<1x128xf32, #tpu.memory_space<vmem>>, vector<1x128xf32>
    %cst_9 = arith.constant dense<0.000000e+00> : vector<128xf32>
    %22 = vector.multi_reduction <add>, %20, %cst_9 [0] : vector<16x128xf32> to vector<128xf32>
    %23 = vector.shape_cast %22 : vector<128xf32> to vector<1x128xf32>
    %24 = arith.addf %21, %23 : vector<1x128xf32>
    %c0_10 = arith.constant 0 : index
    %c0_11 = arith.constant 0 : index
    %25 = vector.load %arg18[%c0_10, %c0_11] : memref<1x128xf32, #tpu.memory_space<vmem>>, vector<1x128xf32>
    tpu.vector_store %arg18[%c0_10, %c0_11], %24 {strides = array<i32>} : memref<1x128xf32, #tpu.memory_space<vmem>>, vector<1x128xf32>,
    %c0_12 = arith.constant 0 : index
    %c0_13 = arith.constant 0 : index
    %26 = vector.load %arg19[%c0_12, %c0_13] : memref<1x128xf32, #tpu.memory_space<vmem>>, vector<1x128xf32>
    %27 = arith.mulf %20, %20 : vector<16x128xf32>
    %cst_14 = arith.constant dense<0.000000e+00> : vector<128xf32>
    %28 = vector.multi_reduction <add>, %27, %cst_14 [0] : vector<16x128xf32> to vector<128xf32>
    %29 = vector.shape_cast %28 : vector<128xf32> to vector<1x128xf32>
    %30 = arith.addf %26, %29 : vector<1x128xf32>
    %c0_15 = arith.constant 0 : index
    %c0_16 = arith.constant 0 : index
    %31 = vector.load %arg19[%c0_15, %c0_16] : memref<1x128xf32, #tpu.memory_space<vmem>>, vector<1x128xf32>
    tpu.vector_store %arg19[%c0_15, %c0_16], %30 {strides = array<i32>} : memref<1x128xf32, #tpu.memory_space<vmem>>, vector<1x128xf32>,
    %c16_i32_17 = arith.constant 16 : i32
    %32 = arith.muli %arg0, %c16_i32_17 : i32
    %33 = tpu.assume_multiple %32, 16 : i32
    %34 = arith.index_cast %33 : i32 to index
    %c0_18 = arith.constant 0 : index
    %35 = vector.load %arg17[%34, %c0_18] : memref<32x128xf32, #tpu.memory_space<vmem>>, vector<16x128xf32>
    tpu.vector_store %arg17[%34, %c0_18], %20 {strides = array<i32>} : memref<32x128xf32, #tpu.memory_space<vmem>>, vector<16x128xf32>,
    %c1_i32 = arith.constant 1 : i32
    %36 = arith.cmpi eq, %arg0, %c1_i32 : i32
    %37 = arith.extui %36 : i1 to i32
    %c0_i32_19 = arith.constant 0 : i32
    %38 = arith.cmpi ne, %37, %c0_i32_19 : i32
    scf.if %38 {
      %39 = tpu.iota {dimensions = array<i32: 0>} : vector<32x1xi32>
      %c24_i32_20 = arith.constant 24 : i32
      %40 = vector.broadcast %c24_i32_20 : i32 to vector<32x1xi32>
      %41 = arith.cmpi slt, %39, %40 : vector<32x1xi32>
      %42 = arith.extui %41 : vector<32x1xi1> to vector<32x1xi32>
      %43 = arith.sitofp %42 : vector<32x1xi32> to vector<32x1xf32>
      %c0_21 = arith.constant 0 : index
      %c0_22 = arith.constant 0 : index
      %44 = vector.load %arg18[%c0_21, %c0_22] : memref<1x128xf32, #tpu.memory_space<vmem>>, vector<1x128xf32>
      %cst_23 = arith.constant 0.0416666679 : f32
      %45 = vector.broadcast %cst_23 : f32 to vector<1x128xf32>
      %46 = arith.mulf %44, %45 : vector<1x128xf32>
      %c0_24 = arith.constant 0 : index
      %c0_25 = arith.constant 0 : index
      %47 = vector.load %arg19[%c0_24, %c0_25] : memref<1x128xf32, #tpu.memory_space<vmem>>, vector<1x128xf32>
      %cst_26 = arith.constant 0.0416666679 : f32
      %48 = vector.broadcast %cst_26 : f32 to vector<1x128xf32>
      %49 = arith.mulf %47, %48 : vector<1x128xf32>
      %50 = arith.mulf %46, %46 : vector<1x128xf32>
      %51 = arith.subf %49, %50 : vector<1x128xf32>
      %cst_27 = arith.constant 0.000000e+00 : f32
      %52 = vector.broadcast %cst_27 : f32 to vector<1x128xf32>
      %53 = arith.maximumf %51, %52 : vector<1x128xf32>
      %c0_28 = arith.constant 0 : index
      %c0_29 = arith.constant 0 : index
      %54 = vector.load %arg4[%c0_28, %c0_29] : memref<1x128xf32, #tpu.memory_space<vmem>>, vector<1x128xf32>
      %cst_30 = arith.constant 9.99999974E-6 : f32
      %55 = vector.broadcast %cst_30 : f32 to vector<1x128xf32>
      %56 = arith.addf %53, %55 : vector<1x128xf32>
      %57 = math.rsqrt %56 : vector<1x128xf32>
      %58 = arith.mulf %54, %57 : vector<1x128xf32>
      %c0_31 = arith.constant 0 : index
      %c0_32 = arith.constant 0 : index
      %59 = vector.load %arg17[%c0_31, %c0_32] : memref<32x128xf32, #tpu.memory_space<vmem>>, vector<32x128xf32>
      %60 = vector.broadcast %58 : vector<1x128xf32> to vector<32x128xf32>
      %61 = arith.mulf %59, %60 : vector<32x128xf32>
      %c0_33 = arith.constant 0 : index
      %c0_34 = arith.constant 0 : index
      %62 = vector.load %arg5[%c0_33, %c0_34] : memref<1x128xf32, #tpu.memory_space<vmem>>, vector<1x128xf32>
      %63 = arith.mulf %46, %58 : vector<1x128xf32>
      %64 = arith.subf %62, %63 : vector<1x128xf32>
      %65 = vector.broadcast %64 : vector<1x128xf32> to vector<32x128xf32>
      %66 = arith.addf %61, %65 : vector<32x128xf32>
      %c0_35 = arith.constant 0 : index
      %c0_36 = arith.constant 0 : index
      %67 = vector.load %arg17[%c0_35, %c0_36] : memref<32x128xf32, #tpu.memory_space<vmem>>, vector<32x128xf32>
      tpu.vector_store %arg17[%c0_35, %c0_36], %66 {strides = array<i32>} : memref<32x128xf32, #tpu.memory_space<vmem>>, vector<32x128xf32>,
      %c0_37 = arith.constant 0 : index
      %c0_38 = arith.constant 0 : index
      %68 = vector.load %arg17[%c0_37, %c0_38] : memref<32x128xf32, #tpu.memory_space<vmem>>, vector<32x128xf32>
      %c0_39 = arith.constant 0 : index
      %c0_40 = arith.constant 0 : index
      %c0_41 = arith.constant 0 : index
      %69 = vector.load %arg6[%c0_39, %c0_40, %c0_41] : memref<3x128x128xf32, #tpu.memory_space<vmem>>, vector<1x128x128xf32>
      %70 = vector.shape_cast %69 : vector<1x128x128xf32> to vector<128x128xf32>
      %cst_42 = arith.constant dense<0.000000e+00> : vector<32x128xf32>
      %71 = tpu.matmul %68, %70, %cst_42 {dimension_numbers = #tpu.dot_dimension_numbers<[1], [0], [0], [1], [0, 0, 1, 1], [], []>} : vector<32x128xf32>, vector<128x128xf32>, vector<32x128xf32> -> vector<32x128xf32>
      %c0_43 = arith.constant 0 : index
      %c0_44 = arith.constant 0 : index
      %c0_45 = arith.constant 0 : index
      %72 = vector.load %arg7[%c0_43, %c0_44, %c0_45] : memref<3x1x128xf32, #tpu.memory_space<vmem>>, vector<1x1x128xf32>
      %73 = vector.shape_cast %72 : vector<1x1x128xf32> to vector<1x128xf32>
      %c0_46 = arith.constant 0 : index
      %c0_47 = arith.constant 0 : index
      %c0_48 = arith.constant 0 : index
      %74 = vector.load %arg8[%c0_46, %c0_47, %c0_48] : memref<3x1x128xf32, #tpu.memory_space<vmem>>, vector<1x1x128xf32>
      %75 = vector.shape_cast %74 : vector<1x1x128xf32> to vector<1x128xf32>
      %76 = vector.broadcast %43 : vector<32x1xf32> to vector<32x128xf32>
      %77 = arith.mulf %71, %76 : vector<32x128xf32>
      %cst_49 = arith.constant dense<0.000000e+00> : vector<128xf32>
      %78 = vector.multi_reduction <add>, %77, %cst_49 [0] : vector<32x128xf32> to vector<128xf32>
      %79 = vector.shape_cast %78 : vector<128xf32> to vector<1x128xf32>
      %80 = arith.mulf %77, %77 : vector<32x128xf32>
      %cst_50 = arith.constant dense<0.000000e+00> : vector<128xf32>
      %81 = vector.multi_reduction <add>, %80, %cst_50 [0] : vector<32x128xf32> to vector<128xf32>
      %82 = vector.shape_cast %81 : vector<128xf32> to vector<1x128xf32>
      %cst_51 = arith.constant 0.0416666679 : f32
      %83 = vector.broadcast %cst_51 : f32 to vector<1x128xf32>
      %84 = arith.mulf %79, %83 : vector<1x128xf32>
      %cst_52 = arith.constant 0.0416666679 : f32
      %85 = vector.broadcast %cst_52 : f32 to vector<1x128xf32>
      %86 = arith.mulf %82, %85 : vector<1x128xf32>
      %87 = arith.mulf %84, %84 : vector<1x128xf32>
      %88 = arith.subf %86, %87 : vector<1x128xf32>
      %cst_53 = arith.constant 0.000000e+00 : f32
      %89 = vector.broadcast %cst_53 : f32 to vector<1x128xf32>
      %90 = arith.maximumf %88, %89 : vector<1x128xf32>
      %cst_54 = arith.constant 9.99999974E-6 : f32
      %91 = vector.broadcast %cst_54 : f32 to vector<1x128xf32>
      %92 = arith.addf %90, %91 : vector<1x128xf32>
      %93 = math.rsqrt %92 : vector<1x128xf32>
      %94 = arith.mulf %73, %93 : vector<1x128xf32>
      %95 = vector.broadcast %94 : vector<1x128xf32> to vector<32x128xf32>
      %96 = arith.mulf %71, %95 : vector<32x128xf32>
      %97 = arith.mulf %84, %94 : vector<1x128xf32>
      %98 = arith.subf %75, %97 : vector<1x128xf32>
      %99 = vector.broadcast %98 : vector<1x128xf32> to vector<32x128xf32>
      %100 = arith.addf %96, %99 : vector<32x128xf32>
      %cst_55 = arith.constant 0.000000e+00 : f32
      %101 = vector.broadcast %cst_55 : f32 to vector<32x128xf32>
      %102 = arith.maximumf %100, %101 : vector<32x128xf32>
      %c0_56 = arith.constant 0 : index
      %c0_57 = arith.constant 0 : index
      %c0_58 = arith.constant 0 : index
      %103 = vector.load %arg9[%c0_56, %c0_57, %c0_58] : memref<3x128x128xf32, #tpu.memory_space<vmem>>, vector<1x128x128xf32>
      %104 = vector.shape_cast %103 : vector<1x128x128xf32> to vector<128x128xf32>
      %cst_59 = arith.constant dense<0.000000e+00> : vector<32x128xf32>
      %105 = tpu.matmul %102, %104, %cst_59 {dimension_numbers = #tpu.dot_dimension_numbers<[1], [0], [0], [1], [0, 0, 1, 1], [], []>} : vector<32x128xf32>, vector<128x128xf32>, vector<32x128xf32> -> vector<32x128xf32>
      %c0_60 = arith.constant 0 : index
      %c0_61 = arith.constant 0 : index
      %c0_62 = arith.constant 0 : index
      %106 = vector.load %arg10[%c0_60, %c0_61, %c0_62] : memref<3x1x128xf32, #tpu.memory_space<vmem>>, vector<1x1x128xf32>
      %107 = vector.shape_cast %106 : vector<1x1x128xf32> to vector<1x128xf32>
      %c0_63 = arith.constant 0 : index
      %c0_64 = arith.constant 0 : index
      %c0_65 = arith.constant 0 : index
      %108 = vector.load %arg11[%c0_63, %c0_64, %c0_65] : memref<3x1x128xf32, #tpu.memory_space<vmem>>, vector<1x1x128xf32>
      %109 = vector.shape_cast %108 : vector<1x1x128xf32> to vector<1x128xf32>
      %110 = vector.broadcast %43 : vector<32x1xf32> to vector<32x128xf32>
      %111 = arith.mulf %105, %110 : vector<32x128xf32>
      %cst_66 = arith.constant dense<0.000000e+00> : vector<128xf32>
      %112 = vector.multi_reduction <add>, %111, %cst_66 [0] : vector<32x128xf32> to vector<128xf32>
      %113 = vector.shape_cast %112 : vector<128xf32> to vector<1x128xf32>
      %114 = arith.mulf %111, %111 : vector<32x128xf32>
      %cst_67 = arith.constant dense<0.000000e+00> : vector<128xf32>
      %115 = vector.multi_reduction <add>, %114, %cst_67 [0] : vector<32x128xf32> to vector<128xf32>
      %116 = vector.shape_cast %115 : vector<128xf32> to vector<1x128xf32>
      %cst_68 = arith.constant 0.0416666679 : f32
      %117 = vector.broadcast %cst_68 : f32 to vector<1x128xf32>
      %118 = arith.mulf %113, %117 : vector<1x128xf32>
      %cst_69 = arith.constant 0.0416666679 : f32
      %119 = vector.broadcast %cst_69 : f32 to vector<1x128xf32>
      %120 = arith.mulf %116, %119 : vector<1x128xf32>
      %121 = arith.mulf %118, %118 : vector<1x128xf32>
      %122 = arith.subf %120, %121 : vector<1x128xf32>
      %cst_70 = arith.constant 0.000000e+00 : f32
      %123 = vector.broadcast %cst_70 : f32 to vector<1x128xf32>
      %124 = arith.maximumf %122, %123 : vector<1x128xf32>
      %cst_71 = arith.constant 9.99999974E-6 : f32
      %125 = vector.broadcast %cst_71 : f32 to vector<1x128xf32>
      %126 = arith.addf %124, %125 : vector<1x128xf32>
      %127 = math.rsqrt %126 : vector<1x128xf32>
      %128 = arith.mulf %107, %127 : vector<1x128xf32>
      %129 = vector.broadcast %128 : vector<1x128xf32> to vector<32x128xf32>
      %130 = arith.mulf %105, %129 : vector<32x128xf32>
      %131 = arith.mulf %118, %128 : vector<1x128xf32>
      %132 = arith.subf %109, %131 : vector<1x128xf32>
      %133 = vector.broadcast %132 : vector<1x128xf32> to vector<32x128xf32>
      %134 = arith.addf %130, %133 : vector<32x128xf32>
      %135 = arith.addf %68, %134 : vector<32x128xf32>
      %cst_72 = arith.constant 0.000000e+00 : f32
      %136 = vector.broadcast %cst_72 : f32 to vector<32x128xf32>
      %137 = arith.maximumf %135, %136 : vector<32x128xf32>
      %c0_73 = arith.constant 0 : index
      %c0_74 = arith.constant 0 : index
      %138 = vector.load %arg17[%c0_73, %c0_74] : memref<32x128xf32, #tpu.memory_space<vmem>>, vector<32x128xf32>
      tpu.vector_store %arg17[%c0_73, %c0_74], %137 {strides = array<i32>} : memref<32x128xf32, #tpu.memory_space<vmem>>, vector<32x128xf32>,
      %c0_75 = arith.constant 0 : index
      %c0_76 = arith.constant 0 : index
      %139 = vector.load %arg17[%c0_75, %c0_76] : memref<32x128xf32, #tpu.memory_space<vmem>>, vector<32x128xf32>
      %c1 = arith.constant 1 : index
      %c0_77 = arith.constant 0 : index
      %c0_78 = arith.constant 0 : index
      %140 = vector.load %arg6[%c1, %c0_77, %c0_78] : memref<3x128x128xf32, #tpu.memory_space<vmem>>, vector<1x128x128xf32>
      %141 = vector.shape_cast %140 : vector<1x128x128xf32> to vector<128x128xf32>
      %cst_79 = arith.constant dense<0.000000e+00> : vector<32x128xf32>
      %142 = tpu.matmul %139, %141, %cst_79 {dimension_numbers = #tpu.dot_dimension_numbers<[1], [0], [0], [1], [0, 0, 1, 1], [], []>} : vector<32x128xf32>, vector<128x128xf32>, vector<32x128xf32> -> vector<32x128xf32>
      %c1_80 = arith.constant 1 : index
      %c0_81 = arith.constant 0 : index
      %c0_82 = arith.constant 0 : index
      %143 = vector.load %arg7[%c1_80, %c0_81, %c0_82] : memref<3x1x128xf32, #tpu.memory_space<vmem>>, vector<1x1x128xf32>
      %144 = vector.shape_cast %143 : vector<1x1x128xf32> to vector<1x128xf32>
      %c1_83 = arith.constant 1 : index
      %c0_84 = arith.constant 0 : index
      %c0_85 = arith.constant 0 : index
      %145 = vector.load %arg8[%c1_83, %c0_84, %c0_85] : memref<3x1x128xf32, #tpu.memory_space<vmem>>, vector<1x1x128xf32>
      %146 = vector.shape_cast %145 : vector<1x1x128xf32> to vector<1x128xf32>
      %147 = vector.broadcast %43 : vector<32x1xf32> to vector<32x128xf32>
      %148 = arith.mulf %142, %147 : vector<32x128xf32>
      %cst_86 = arith.constant dense<0.000000e+00> : vector<128xf32>
      %149 = vector.multi_reduction <add>, %148, %cst_86 [0] : vector<32x128xf32> to vector<128xf32>
      %150 = vector.shape_cast %149 : vector<128xf32> to vector<1x128xf32>
      %151 = arith.mulf %148, %148 : vector<32x128xf32>
      %cst_87 = arith.constant dense<0.000000e+00> : vector<128xf32>
      %152 = vector.multi_reduction <add>, %151, %cst_87 [0] : vector<32x128xf32> to vector<128xf32>
      %153 = vector.shape_cast %152 : vector<128xf32> to vector<1x128xf32>
      %cst_88 = arith.constant 0.0416666679 : f32
      %154 = vector.broadcast %cst_88 : f32 to vector<1x128xf32>
      %155 = arith.mulf %150, %154 : vector<1x128xf32>
      %cst_89 = arith.constant 0.0416666679 : f32
      %156 = vector.broadcast %cst_89 : f32 to vector<1x128xf32>
      %157 = arith.mulf %153, %156 : vector<1x128xf32>
      %158 = arith.mulf %155, %155 : vector<1x128xf32>
      %159 = arith.subf %157, %158 : vector<1x128xf32>
      %cst_90 = arith.constant 0.000000e+00 : f32
      %160 = vector.broadcast %cst_90 : f32 to vector<1x128xf32>
      %161 = arith.maximumf %159, %160 : vector<1x128xf32>
      %cst_91 = arith.constant 9.99999974E-6 : f32
      %162 = vector.broadcast %cst_91 : f32 to vector<1x128xf32>
      %163 = arith.addf %161, %162 : vector<1x128xf32>
      %164 = math.rsqrt %163 : vector<1x128xf32>
      %165 = arith.mulf %144, %164 : vector<1x128xf32>
      %166 = vector.broadcast %165 : vector<1x128xf32> to vector<32x128xf32>
      %167 = arith.mulf %142, %166 : vector<32x128xf32>
      %168 = arith.mulf %155, %165 : vector<1x128xf32>
      %169 = arith.subf %146, %168 : vector<1x128xf32>
      %170 = vector.broadcast %169 : vector<1x128xf32> to vector<32x128xf32>
      %171 = arith.addf %167, %170 : vector<32x128xf32>
      %cst_92 = arith.constant 0.000000e+00 : f32
      %172 = vector.broadcast %cst_92 : f32 to vector<32x128xf32>
      %173 = arith.maximumf %171, %172 : vector<32x128xf32>
      %c1_93 = arith.constant 1 : index
      %c0_94 = arith.constant 0 : index
      %c0_95 = arith.constant 0 : index
      %174 = vector.load %arg9[%c1_93, %c0_94, %c0_95] : memref<3x128x128xf32, #tpu.memory_space<vmem>>, vector<1x128x128xf32>
      %175 = vector.shape_cast %174 : vector<1x128x128xf32> to vector<128x128xf32>
      %cst_96 = arith.constant dense<0.000000e+00> : vector<32x128xf32>
      %176 = tpu.matmul %173, %175, %cst_96 {dimension_numbers = #tpu.dot_dimension_numbers<[1], [0], [0], [1], [0, 0, 1, 1], [], []>} : vector<32x128xf32>, vector<128x128xf32>, vector<32x128xf32> -> vector<32x128xf32>
      %c1_97 = arith.constant 1 : index
      %c0_98 = arith.constant 0 : index
      %c0_99 = arith.constant 0 : index
      %177 = vector.load %arg10[%c1_97, %c0_98, %c0_99] : memref<3x1x128xf32, #tpu.memory_space<vmem>>, vector<1x1x128xf32>
      %178 = vector.shape_cast %177 : vector<1x1x128xf32> to vector<1x128xf32>
      %c1_100 = arith.constant 1 : index
      %c0_101 = arith.constant 0 : index
      %c0_102 = arith.constant 0 : index
      %179 = vector.load %arg11[%c1_100, %c0_101, %c0_102] : memref<3x1x128xf32, #tpu.memory_space<vmem>>, vector<1x1x128xf32>
      %180 = vector.shape_cast %179 : vector<1x1x128xf32> to vector<1x128xf32>
      %181 = vector.broadcast %43 : vector<32x1xf32> to vector<32x128xf32>
      %182 = arith.mulf %176, %181 : vector<32x128xf32>
      %cst_103 = arith.constant dense<0.000000e+00> : vector<128xf32>
      %183 = vector.multi_reduction <add>, %182, %cst_103 [0] : vector<32x128xf32> to vector<128xf32>
      %184 = vector.shape_cast %183 : vector<128xf32> to vector<1x128xf32>
      %185 = arith.mulf %182, %182 : vector<32x128xf32>
      %cst_104 = arith.constant dense<0.000000e+00> : vector<128xf32>
      %186 = vector.multi_reduction <add>, %185, %cst_104 [0] : vector<32x128xf32> to vector<128xf32>
      %187 = vector.shape_cast %186 : vector<128xf32> to vector<1x128xf32>
      %cst_105 = arith.constant 0.0416666679 : f32
      %188 = vector.broadcast %cst_105 : f32 to vector<1x128xf32>
      %189 = arith.mulf %184, %188 : vector<1x128xf32>
      %cst_106 = arith.constant 0.0416666679 : f32
      %190 = vector.broadcast %cst_106 : f32 to vector<1x128xf32>
      %191 = arith.mulf %187, %190 : vector<1x128xf32>
      %192 = arith.mulf %189, %189 : vector<1x128xf32>
      %193 = arith.subf %191, %192 : vector<1x128xf32>
      %cst_107 = arith.constant 0.000000e+00 : f32
      %194 = vector.broadcast %cst_107 : f32 to vector<1x128xf32>
      %195 = arith.maximumf %193, %194 : vector<1x128xf32>
      %cst_108 = arith.constant 9.99999974E-6 : f32
      %196 = vector.broadcast %cst_108 : f32 to vector<1x128xf32>
      %197 = arith.addf %195, %196 : vector<1x128xf32>
      %198 = math.rsqrt %197 : vector<1x128xf32>
      %199 = arith.mulf %178, %198 : vector<1x128xf32>
      %200 = vector.broadcast %199 : vector<1x128xf32> to vector<32x128xf32>
      %201 = arith.mulf %176, %200 : vector<32x128xf32>
      %202 = arith.mulf %189, %199 : vector<1x128xf32>
      %203 = arith.subf %180, %202 : vector<1x128xf32>
      %204 = vector.broadcast %203 : vector<1x128xf32> to vector<32x128xf32>
      %205 = arith.addf %201, %204 : vector<32x128xf32>
      %206 = arith.addf %139, %205 : vector<32x128xf32>
      %cst_109 = arith.constant 0.000000e+00 : f32
      %207 = vector.broadcast %cst_109 : f32 to vector<32x128xf32>
      %208 = arith.maximumf %206, %207 : vector<32x128xf32>
      %c0_110 = arith.constant 0 : index
      %c0_111 = arith.constant 0 : index
      %209 = vector.load %arg17[%c0_110, %c0_111] : memref<32x128xf32, #tpu.memory_space<vmem>>, vector<32x128xf32>
      tpu.vector_store %arg17[%c0_110, %c0_111], %208 {strides = array<i32>} : memref<32x128xf32, #tpu.memory_space<vmem>>, vector<32x128xf32>,
      %c0_112 = arith.constant 0 : index
      %c0_113 = arith.constant 0 : index
      %210 = vector.load %arg17[%c0_112, %c0_113] : memref<32x128xf32, #tpu.memory_space<vmem>>, vector<32x128xf32>
      %c2 = arith.constant 2 : index
      %c0_114 = arith.constant 0 : index
      %c0_115 = arith.constant 0 : index
      %211 = vector.load %arg6[%c2, %c0_114, %c0_115] : memref<3x128x128xf32, #tpu.memory_space<vmem>>, vector<1x128x128xf32>
      %212 = vector.shape_cast %211 : vector<1x128x128xf32> to vector<128x128xf32>
      %cst_116 = arith.constant dense<0.000000e+00> : vector<32x128xf32>
      %213 = tpu.matmul %210, %212, %cst_116 {dimension_numbers = #tpu.dot_dimension_numbers<[1], [0], [0], [1], [0, 0, 1, 1], [], []>} : vector<32x128xf32>, vector<128x128xf32>, vector<32x128xf32> -> vector<32x128xf32>
      %c2_117 = arith.constant 2 : index
      %c0_118 = arith.constant 0 : index
      %c0_119 = arith.constant 0 : index
      %214 = vector.load %arg7[%c2_117, %c0_118, %c0_119] : memref<3x1x128xf32, #tpu.memory_space<vmem>>, vector<1x1x128xf32>
      %215 = vector.shape_cast %214 : vector<1x1x128xf32> to vector<1x128xf32>
      %c2_120 = arith.constant 2 : index
      %c0_121 = arith.constant 0 : index
      %c0_122 = arith.constant 0 : index
      %216 = vector.load %arg8[%c2_120, %c0_121, %c0_122] : memref<3x1x128xf32, #tpu.memory_space<vmem>>, vector<1x1x128xf32>
      %217 = vector.shape_cast %216 : vector<1x1x128xf32> to vector<1x128xf32>
      %218 = vector.broadcast %43 : vector<32x1xf32> to vector<32x128xf32>
      %219 = arith.mulf %213, %218 : vector<32x128xf32>
      %cst_123 = arith.constant dense<0.000000e+00> : vector<128xf32>
      %220 = vector.multi_reduction <add>, %219, %cst_123 [0] : vector<32x128xf32> to vector<128xf32>
      %221 = vector.shape_cast %220 : vector<128xf32> to vector<1x128xf32>
      %222 = arith.mulf %219, %219 : vector<32x128xf32>
      %cst_124 = arith.constant dense<0.000000e+00> : vector<128xf32>
      %223 = vector.multi_reduction <add>, %222, %cst_124 [0] : vector<32x128xf32> to vector<128xf32>
      %224 = vector.shape_cast %223 : vector<128xf32> to vector<1x128xf32>
      %cst_125 = arith.constant 0.0416666679 : f32
      %225 = vector.broadcast %cst_125 : f32 to vector<1x128xf32>
      %226 = arith.mulf %221, %225 : vector<1x128xf32>
      %cst_126 = arith.constant 0.0416666679 : f32
      %227 = vector.broadcast %cst_126 : f32 to vector<1x128xf32>
      %228 = arith.mulf %224, %227 : vector<1x128xf32>
      %229 = arith.mulf %226, %226 : vector<1x128xf32>
      %230 = arith.subf %228, %229 : vector<1x128xf32>
      %cst_127 = arith.constant 0.000000e+00 : f32
      %231 = vector.broadcast %cst_127 : f32 to vector<1x128xf32>
      %232 = arith.maximumf %230, %231 : vector<1x128xf32>
      %cst_128 = arith.constant 9.99999974E-6 : f32
      %233 = vector.broadcast %cst_128 : f32 to vector<1x128xf32>
      %234 = arith.addf %232, %233 : vector<1x128xf32>
      %235 = math.rsqrt %234 : vector<1x128xf32>
      %236 = arith.mulf %215, %235 : vector<1x128xf32>
      %237 = vector.broadcast %236 : vector<1x128xf32> to vector<32x128xf32>
      %238 = arith.mulf %213, %237 : vector<32x128xf32>
      %239 = arith.mulf %226, %236 : vector<1x128xf32>
      %240 = arith.subf %217, %239 : vector<1x128xf32>
      %241 = vector.broadcast %240 : vector<1x128xf32> to vector<32x128xf32>
      %242 = arith.addf %238, %241 : vector<32x128xf32>
      %cst_129 = arith.constant 0.000000e+00 : f32
      %243 = vector.broadcast %cst_129 : f32 to vector<32x128xf32>
      %244 = arith.maximumf %242, %243 : vector<32x128xf32>
      %c2_130 = arith.constant 2 : index
      %c0_131 = arith.constant 0 : index
      %c0_132 = arith.constant 0 : index
      %245 = vector.load %arg9[%c2_130, %c0_131, %c0_132] : memref<3x128x128xf32, #tpu.memory_space<vmem>>, vector<1x128x128xf32>
      %246 = vector.shape_cast %245 : vector<1x128x128xf32> to vector<128x128xf32>
      %cst_133 = arith.constant dense<0.000000e+00> : vector<32x128xf32>
      %247 = tpu.matmul %244, %246, %cst_133 {dimension_numbers = #tpu.dot_dimension_numbers<[1], [0], [0], [1], [0, 0, 1, 1], [], []>} : vector<32x128xf32>, vector<128x128xf32>, vector<32x128xf32> -> vector<32x128xf32>
      %c2_134 = arith.constant 2 : index
      %c0_135 = arith.constant 0 : index
      %c0_136 = arith.constant 0 : index
      %248 = vector.load %arg10[%c2_134, %c0_135, %c0_136] : memref<3x1x128xf32, #tpu.memory_space<vmem>>, vector<1x1x128xf32>
      %249 = vector.shape_cast %248 : vector<1x1x128xf32> to vector<1x128xf32>
      %c2_137 = arith.constant 2 : index
      %c0_138 = arith.constant 0 : index
      %c0_139 = arith.constant 0 : index
      %250 = vector.load %arg11[%c2_137, %c0_138, %c0_139] : memref<3x1x128xf32, #tpu.memory_space<vmem>>, vector<1x1x128xf32>
      %251 = vector.shape_cast %250 : vector<1x1x128xf32> to vector<1x128xf32>
      %252 = vector.broadcast %43 : vector<32x1xf32> to vector<32x128xf32>
      %253 = arith.mulf %247, %252 : vector<32x128xf32>
      %cst_140 = arith.constant dense<0.000000e+00> : vector<128xf32>
      %254 = vector.multi_reduction <add>, %253, %cst_140 [0] : vector<32x128xf32> to vector<128xf32>
      %255 = vector.shape_cast %254 : vector<128xf32> to vector<1x128xf32>
      %256 = arith.mulf %253, %253 : vector<32x128xf32>
      %cst_141 = arith.constant dense<0.000000e+00> : vector<128xf32>
      %257 = vector.multi_reduction <add>, %256, %cst_141 [0] : vector<32x128xf32> to vector<128xf32>
      %258 = vector.shape_cast %257 : vector<128xf32> to vector<1x128xf32>
      %cst_142 = arith.constant 0.0416666679 : f32
      %259 = vector.broadcast %cst_142 : f32 to vector<1x128xf32>
      %260 = arith.mulf %255, %259 : vector<1x128xf32>
      %cst_143 = arith.constant 0.0416666679 : f32
      %261 = vector.broadcast %cst_143 : f32 to vector<1x128xf32>
      %262 = arith.mulf %258, %261 : vector<1x128xf32>
      %263 = arith.mulf %260, %260 : vector<1x128xf32>
      %264 = arith.subf %262, %263 : vector<1x128xf32>
      %cst_144 = arith.constant 0.000000e+00 : f32
      %265 = vector.broadcast %cst_144 : f32 to vector<1x128xf32>
      %266 = arith.maximumf %264, %265 : vector<1x128xf32>
      %cst_145 = arith.constant 9.99999974E-6 : f32
      %267 = vector.broadcast %cst_145 : f32 to vector<1x128xf32>
      %268 = arith.addf %266, %267 : vector<1x128xf32>
      %269 = math.rsqrt %268 : vector<1x128xf32>
      %270 = arith.mulf %249, %269 : vector<1x128xf32>
      %271 = vector.broadcast %270 : vector<1x128xf32> to vector<32x128xf32>
      %272 = arith.mulf %247, %271 : vector<32x128xf32>
      %273 = arith.mulf %260, %270 : vector<1x128xf32>
      %274 = arith.subf %251, %273 : vector<1x128xf32>
      %275 = vector.broadcast %274 : vector<1x128xf32> to vector<32x128xf32>
      %276 = arith.addf %272, %275 : vector<32x128xf32>
      %277 = arith.addf %210, %276 : vector<32x128xf32>
      %cst_146 = arith.constant 0.000000e+00 : f32
      %278 = vector.broadcast %cst_146 : f32 to vector<32x128xf32>
      %279 = arith.maximumf %277, %278 : vector<32x128xf32>
      %c0_147 = arith.constant 0 : index
      %c0_148 = arith.constant 0 : index
      %280 = vector.load %arg17[%c0_147, %c0_148] : memref<32x128xf32, #tpu.memory_space<vmem>>, vector<32x128xf32>
      tpu.vector_store %arg17[%c0_147, %c0_148], %279 {strides = array<i32>} : memref<32x128xf32, #tpu.memory_space<vmem>>, vector<32x128xf32>,
      %c0_149 = arith.constant 0 : index
      %c0_150 = arith.constant 0 : index
      %281 = vector.load %arg17[%c0_149, %c0_150] : memref<32x128xf32, #tpu.memory_space<vmem>>, vector<32x128xf32>
      %c0_151 = arith.constant 0 : index
      %c0_152 = arith.constant 0 : index
      %282 = vector.load %arg12[%c0_151, %c0_152] : memref<128x128xf32, #tpu.memory_space<vmem>>, vector<128x128xf32>
      %cst_153 = arith.constant dense<0.000000e+00> : vector<32x128xf32>
      %283 = tpu.matmul %281, %282, %cst_153 {dimension_numbers = #tpu.dot_dimension_numbers<[1], [0], [0], [1], [0, 0, 1, 1], [], []>} : vector<32x128xf32>, vector<128x128xf32>, vector<32x128xf32> -> vector<32x128xf32>
      %c0_154 = arith.constant 0 : index
      %c0_155 = arith.constant 0 : index
      %284 = vector.load %arg13[%c0_154, %c0_155] : memref<1x128xf32, #tpu.memory_space<vmem>>, vector<1x128xf32>
      %285 = vector.broadcast %284 : vector<1x128xf32> to vector<32x128xf32>
      %286 = arith.addf %283, %285 : vector<32x128xf32>
      %cst_156 = arith.constant 0.000000e+00 : f32
      %287 = vector.broadcast %cst_156 : f32 to vector<32x128xf32>
      %288 = arith.maximumf %286, %287 : vector<32x128xf32>
      %c0_157 = arith.constant 0 : index
      %c0_158 = arith.constant 0 : index
      %289 = vector.load %arg14[%c0_157, %c0_158] : memref<128x128xf32, #tpu.memory_space<vmem>>, vector<128x128xf32>
      %cst_159 = arith.constant dense<0.000000e+00> : vector<32x128xf32>
      %290 = tpu.matmul %288, %289, %cst_159 {dimension_numbers = #tpu.dot_dimension_numbers<[1], [0], [0], [1], [0, 0, 1, 1], [], []>} : vector<32x128xf32>, vector<128x128xf32>, vector<32x128xf32> -> vector<32x128xf32>
      %c0_160 = arith.constant 0 : index
      %c0_161 = arith.constant 0 : index
      %291 = vector.load %arg15[%c0_160, %c0_161] : memref<1x128xf32, #tpu.memory_space<vmem>>, vector<1x128xf32>
      %292 = vector.broadcast %291 : vector<1x128xf32> to vector<32x128xf32>
      %293 = arith.addf %290, %292 : vector<32x128xf32>
      %c0_162 = arith.constant 0 : index
      %c0_163 = arith.constant 0 : index
      %294 = vector.load %arg16[%c0_162, %c0_163] : memref<32x128xf32, #tpu.memory_space<vmem>>, vector<32x128xf32>
      tpu.vector_store %arg16[%c0_162, %c0_163], %293 {strides = array<i32>} : memref<32x128xf32, #tpu.memory_space<vmem>>, vector<32x128xf32>,
    } else {
    }
    return
  }
  func.func @transform_0(%arg0: i32) -> (i32, i32) {
    %c0_i32 = arith.constant 0 : i32
    %c0_i32_0 = arith.constant 0 : i32
    return %arg0, %c0_i32 : i32, i32
  }
  func.func @transform_1(%arg0: i32) -> (i32, i32) {
    %c0_i32 = arith.constant 0 : i32
    %c0_i32_0 = arith.constant 0 : i32
    %c0_i32_1 = arith.constant 0 : i32
    return %c0_i32, %c0_i32_0 : i32, i32
  }
  func.func @transform_2(%arg0: i32) -> (i32, i32) {
    %c0_i32 = arith.constant 0 : i32
    %c0_i32_0 = arith.constant 0 : i32
    %c0_i32_1 = arith.constant 0 : i32
    return %c0_i32, %c0_i32_0 : i32, i32
  }
  func.func @transform_3(%arg0: i32) -> (i32, i32) {
    %c0_i32 = arith.constant 0 : i32
    %c0_i32_0 = arith.constant 0 : i32
    %c0_i32_1 = arith.constant 0 : i32
    return %c0_i32, %c0_i32_0 : i32, i32
  }
  func.func @transform_4(%arg0: i32) -> (i32, i32) {
    %c0_i32 = arith.constant 0 : i32
    %c0_i32_0 = arith.constant 0 : i32
    %c0_i32_1 = arith.constant 0 : i32
    return %c0_i32, %c0_i32_0 : i32, i32
  }
  func.func @transform_5(%arg0: i32) -> (i32, i32, i32) {
    %c0_i32 = arith.constant 0 : i32
    %c0_i32_0 = arith.constant 0 : i32
    %c0_i32_1 = arith.constant 0 : i32
    %c0_i32_2 = arith.constant 0 : i32
    return %c0_i32, %c0_i32_0, %c0_i32_1 : i32, i32, i32
  }
  func.func @transform_6(%arg0: i32) -> (i32, i32, i32) {
    %c0_i32 = arith.constant 0 : i32
    %c0_i32_0 = arith.constant 0 : i32
    %c0_i32_1 = arith.constant 0 : i32
    %c0_i32_2 = arith.constant 0 : i32
    return %c0_i32, %c0_i32_0, %c0_i32_1 : i32, i32, i32
  }
  func.func @transform_7(%arg0: i32) -> (i32, i32, i32) {
    %c0_i32 = arith.constant 0 : i32
    %c0_i32_0 = arith.constant 0 : i32
    %c0_i32_1 = arith.constant 0 : i32
    %c0_i32_2 = arith.constant 0 : i32
    return %c0_i32, %c0_i32_0, %c0_i32_1 : i32, i32, i32
  }
  func.func @transform_8(%arg0: i32) -> (i32, i32, i32) {
    %c0_i32 = arith.constant 0 : i32
    %c0_i32_0 = arith.constant 0 : i32
    %c0_i32_1 = arith.constant 0 : i32
    %c0_i32_2 = arith.constant 0 : i32
    return %c0_i32, %c0_i32_0, %c0_i32_1 : i32, i32, i32
  }
  func.func @transform_9(%arg0: i32) -> (i32, i32, i32) {
    %c0_i32 = arith.constant 0 : i32
    %c0_i32_0 = arith.constant 0 : i32
    %c0_i32_1 = arith.constant 0 : i32
    %c0_i32_2 = arith.constant 0 : i32
    return %c0_i32, %c0_i32_0, %c0_i32_1 : i32, i32, i32
  }
  func.func @transform_10(%arg0: i32) -> (i32, i32, i32) {
    %c0_i32 = arith.constant 0 : i32
    %c0_i32_0 = arith.constant 0 : i32
    %c0_i32_1 = arith.constant 0 : i32
    %c0_i32_2 = arith.constant 0 : i32
    return %c0_i32, %c0_i32_0, %c0_i32_1 : i32, i32, i32
  }
  func.func @transform_11(%arg0: i32) -> (i32, i32) {
    %c0_i32 = arith.constant 0 : i32
    %c0_i32_0 = arith.constant 0 : i32
    %c0_i32_1 = arith.constant 0 : i32
    return %c0_i32, %c0_i32_0 : i32, i32
  }
  func.func @transform_12(%arg0: i32) -> (i32, i32) {
    %c0_i32 = arith.constant 0 : i32
    %c0_i32_0 = arith.constant 0 : i32
    %c0_i32_1 = arith.constant 0 : i32
    return %c0_i32, %c0_i32_0 : i32, i32
  }
  func.func @transform_13(%arg0: i32) -> (i32, i32) {
    %c0_i32 = arith.constant 0 : i32
    %c0_i32_0 = arith.constant 0 : i32
    %c0_i32_1 = arith.constant 0 : i32
    return %c0_i32, %c0_i32_0 : i32, i32
  }
  func.func @transform_14(%arg0: i32) -> (i32, i32) {
    %c0_i32 = arith.constant 0 : i32
    %c0_i32_0 = arith.constant 0 : i32
    %c0_i32_1 = arith.constant 0 : i32
    return %c0_i32, %c0_i32_0 : i32, i32
  }
  func.func @transform_15(%arg0: i32) -> (i32, i32) {
    %c0_i32 = arith.constant 0 : i32
    %c0_i32_0 = arith.constant 0 : i32
    %c0_i32_1 = arith.constant 0 : i32
    return %c0_i32, %c0_i32_0 : i32, i32
  }
}

</mosaic_0001>

<llo_original>
// kernel: tpu_custom_call.1
$region0: #{tpu_custom_call.1}
  #allocation0 [shape = 'u32[]', space=smem, size = 0x4, offset = 0x4, fixed_abs, tag = 'smem constant byte address 0x4 - core index']
  #allocation1 [shape = 'u32[72,128]{1,0:T(1,128)}', space=vmem, size = 0x9000, scoped, tag = 'internal scratch']
  #allocation2 [shape = 'f32[32,128]{1,0:T(8,128)}', space=vmem, size = 0x4000, scoped, tag = 'scratch operand']
  #allocation3 [shape = 'f32[1,128]{1,0:T(1,128)}', space=vmem, size = 0x200, scoped, tag = 'scratch operand']
  #allocation4 [shape = 'f32[1,128]{1,0:T(1,128)}', space=vmem, size = 0x200, scoped, tag = 'scratch operand']
  %s0 = inlined_call_operand.hbm [shape: f32[32,32], index: 0, kind: input, shape index: {}]
  %s1 = inlined_call_operand.hbm [shape: f32[32,128], index: 1, kind: input, shape index: {}]
  %s2 = inlined_call_operand.hbm [shape: f32[1,128], index: 2, kind: input, shape index: {}]
  %s3 = inlined_call_operand.hbm [shape: f32[1,128], index: 3, kind: input, shape index: {}]
  %s4 = inlined_call_operand.hbm [shape: f32[1,128], index: 4, kind: input, shape index: {}]
  %s5 = inlined_call_operand.hbm [shape: f32[3,128,128], index: 5, kind: input, shape index: {}]
  %s6 = inlined_call_operand.vmem [shape: f32[3,1,128], index: 6, kind: input, shape index: {}]
  %s7 = inlined_call_operand.vmem [shape: f32[3,1,128], index: 7, kind: input, shape index: {}]
  %s8 = inlined_call_operand.hbm [shape: f32[3,128,128], index: 8, kind: input, shape index: {}]
  %s9 = inlined_call_operand.hbm [shape: f32[3,1,128], index: 9, kind: input, shape index: {}]
  %s10 = inlined_call_operand.vmem [shape: f32[3,1,128], index: 10, kind: input, shape index: {}]
  %s11 = inlined_call_operand.hbm [shape: f32[128,128], index: 11, kind: input, shape index: {}]
  %s12 = inlined_call_operand.vmem [shape: f32[1,128], index: 12, kind: input, shape index: {}]
  %s13 = inlined_call_operand.hbm [shape: f32[128,128], index: 13, kind: input, shape index: {}]
  %s14 = inlined_call_operand.vmem [shape: f32[1,128], index: 14, kind: input, shape index: {}]
  %s15 = inlined_call_operand.hbm [shape: f32[32,128], index: 15, kind: output, shape index: {}]
  %s16 = sld [smem:[#allocation0]]
  $region141: #{tpu_custom_call.1} parent=0
    _
  %s18 = ssub.s32 1, %s16
  %s19 = scalar_select 0, %s18, %s16
  $region1: #{tpu_custom_call.1} parent=0
    #allocation5 [shape = 'u8[16384]{0}', space=vmem, size = 0x4000, scoped, tag = 'input window, operand 0']
    #allocation6 [shape = 's32[2]{0}', space=sflag, size = 0x8, scoped, tag = 'scoped memory for tpu_custom_call.1']
    #allocation7 [shape = 's32[2]{0}', space=sflag, size = 0x8, scoped, tag = 'scoped memory for tpu_custom_call.1']
    #allocation8 [shape = 'u8[16384]{0}', space=vmem, size = 0x4000, scoped, tag = 'input window, operand 1, single buffered']
    #allocation9 [shape = 's32[1]{0}', space=sflag, size = 0x4, scoped, tag = 'scoped memory for tpu_custom_call.1']
    #allocation10 [shape = 'u8[512]{0}', space=vmem, size = 0x400, scoped, tag = 'input window, operand 2, single buffered']
    #allocation11 [shape = 'u8[512]{0}', space=vmem, size = 0x400, scoped, tag = 'input window, operand 3, single buffered']
    #allocation12 [shape = 's32[1]{0}', space=sflag, size = 0x4, scoped, tag = 'scoped memory for tpu_custom_call.1']
    #allocation13 [shape = 'u8[512]{0}', space=vmem, size = 0x400, scoped, tag = 'input window, operand 4, single buffered']
    #allocation14 [shape = 'u8[196608]{0}', space=vmem, size = 0x30000, scoped, tag = 'input window, operand 5, single buffered']
    #allocation15 [shape = 's32[1]{0}', space=sflag, size = 0x4, scoped, tag = 'scoped memory for tpu_custom_call.1']
    #allocation16 [shape = 'u8[196608]{0}', space=vmem, size = 0x30000, scoped, tag = 'input window, operand 8, single buffered']
    #allocation17 [shape = 'u8[1536]{0}', space=vmem, size = 0x800, scoped, tag = 'input window, operand 9, single buffered']
    #allocation18 [shape = 's32[1]{0}', space=sflag, size = 0x4, scoped, tag = 'scoped memory for tpu_custom_call.1']
    #allocation19 [shape = 'u8[65536]{0}', space=vmem, size = 0x10000, scoped, tag = 'input window, operand 11, single buffered']
    #allocation20 [shape = 'u8[65536]{0}', space=vmem, size = 0x10000, scoped, tag = 'input window, operand 13, single buffered']
    #allocation21 [shape = 's32[1]{0}', space=sflag, size = 0x4, scoped, tag = 'scoped memory for tpu_custom_call.1']
    #allocation22 [shape = 'u8[16384]{0}', space=vmem, size = 0x4000, scoped, tag = 'output window, operand 0, single buffered']
    %20 = vsyncpa [#allocation6], 0
    %s21 = scalar_lea.sflag [#allocation6], 1
    %22 = vsyncpa %s21, 0
    %23 = vsyncpa [#allocation9], 0
    %24 = vsyncpa [#allocation12], 0
    %25 = vsyncpa [#allocation15], 0
    %26 = vsyncpa [#allocation18], 0
    %27 = vsyncpa [#allocation21], 0
    %28 = vsyncpa [#allocation7], 0
    loop: start=0, step=1, limit=4
    $region2: #{tpu_custom_call.1} parent=1 // loop_pre_header
      _
    $region3: #{tpu_custom_call.1} parent=1 // loop_header
      %s30 = sphi 0, %s34
      %p31 = scmp.ge.s32.totalorder %s30, 4
      %s40 = sphi 0, %s42
      %s43 = sphi 0, %s40
      %s44 = sphi 0, %s43
      %s60 = sphi 0, %s44
      %s64 = sphi 0, %s64
      %s66 = sphi 0, %s64
      %s67 = sphi 0, %s66
      %s81 = sphi 0, %s67
      %s85 = sphi 0, %s85
      %s87 = sphi 0, %s85
      %s88 = sphi 0, %s87
      %s102 = sphi 0, %s88
      %s106 = sphi 0, %s106
      %s108 = sphi 0, %s106
      %s109 = sphi 0, %s108
      %s123 = sphi 0, %s109
      %s127 = sphi 0, %s127
      %s129 = sphi 0, %s127
      %s130 = sphi 0, %s129
      %s144 = sphi 0, %s130
      %s148 = sphi 0, %s148
      %s150 = sphi 0, %s148
      %s151 = sphi 0, %s150
      %s165 = sphi 0, %s151
      %s169 = sphi 0, %s169
      %s171 = sphi 0, %s169
      %s172 = sphi 0, %s171
      %s186 = sphi 0, %s172
      %s190 = sphi 0, %s190
      %s192 = sphi 0, %s190
      %s193 = sphi 0, %s192
      %s207 = sphi 0, %s193
      %s211 = sphi 0, %s211
      %s213 = sphi 0, %s211
      %s214 = sphi 0, %s213
      %s228 = sphi 0, %s214
      %s232 = sphi 0, %s232
      %s234 = sphi 0, %s232
      %s235 = sphi 0, %s234
      %s249 = sphi 0, %s235
      %s253 = sphi 0, %s253
      %s255 = sphi 0, %s253
      %s256 = sphi 0, %s255
      %s270 = sphi 0, %s256
      %s274 = sphi 0, %s274
      %s276 = sphi 0, %s274
      %s277 = sphi 0, %s276
      %s291 = sphi 0, %s277
      %s295 = sphi 0, %s295
      %s297 = sphi 0, %s295
      %s298 = sphi 0, %s297
      %s312 = sphi 0, %s298
      %s316 = sphi 0, %s316
      %s318 = sphi 0, %s316
      %s319 = sphi 0, %s318
      %s333 = sphi 0, %s319
      %s337 = sphi 0, %s337
      %s339 = sphi 0, %s337
      %s340 = sphi 0, %s339
      %s354 = sphi 0, %s340
      %s358 = sphi 0, %s358
      %s360 = sphi 0, %s358
      %s361 = sphi 0, %s360
      %s375 = sphi 0, %s361
    $region4: #{tpu_custom_call.1} parent=1 // loop_header_branch
      %33 = sbr.rel (%p31) target = $region8
    $region5: #{tpu_custom_call.1} parent=1 // loop_body
      %s35 = ssub.s32 %s30, 1
      %s36 = ssub.s32 %s30, 2
      %s37 = sadd.s32 %s30, 1
      %s38 = ssub.s32 %s30, %s37
      %p39 = scmp.eq.s32.totalorder %s38, 0
      %s41 = sadd.s32 %s40, 1
      %s42 = scalar_select %p39, %s40, %s41
      %p45 = pneg %p39
      %p46 = scmp.eq.s32.totalorder %s30, 1
      %p47 = por %p45, %p46
      %p48 = scmp.ne.s32.totalorder %s40, %s43
      %p49 = scmp.eq.s32.totalorder %s30, 0
      %p50 = por %p48, %p49
      %p51 = scmp.ne.s32.totalorder %s40, %s43
      %p52 = scmp.eq.s32.totalorder %s35, 1
      %p53 = por %p51, %p52
      %p54 = scmp.ne.s32.totalorder %s43, %s44
      %p55 = scmp.eq.s32.totalorder %s35, 0
      %p56 = por %p54, %p55
      %p57 = scmp.ne.s32.totalorder %s43, %s44
      %p58 = scmp.eq.s32.totalorder %s36, 1
      %p59 = por %p57, %p58
      %p61 = scmp.ne.s32.totalorder %s44, %s60
      %p62 = scmp.eq.s32.totalorder %s36, 0
      %p63 = por %p61, %p62
      %s65 = sadd.s32 %s64, 1
      %p68 = scmp.eq.s32.totalorder %s30, 1
      %p69 = scmp.ne.s32.totalorder %s64, %s66
      %p70 = scmp.eq.s32.totalorder %s30, 0
      %p71 = por %p69, %p70
      %p72 = scmp.ne.s32.totalorder %s64, %s66
      %p73 = scmp.eq.s32.totalorder %s35, 1
      %p74 = por %p72, %p73
      %p75 = scmp.ne.s32.totalorder %s66, %s67
      %p76 = scmp.eq.s32.totalorder %s35, 0
      %p77 = por %p75, %p76
      %p78 = scmp.ne.s32.totalorder %s66, %s67
      %p79 = scmp.eq.s32.totalorder %s36, 1
      %p80 = por %p78, %p79
      %p82 = scmp.ne.s32.totalorder %s67, %s81
      %p83 = scmp.eq.s32.totalorder %s36, 0
      %p84 = por %p82, %p83
      %s86 = sadd.s32 %s85, 1
      %p89 = scmp.eq.s32.totalorder %s30, 1
      %p90 = scmp.ne.s32.totalorder %s85, %s87
      %p91 = scmp.eq.s32.totalorder %s30, 0
      %p92 = por %p90, %p91
      %p93 = scmp.ne.s32.totalorder %s85, %s87
      %p94 = scmp.eq.s32.totalorder %s35, 1
      %p95 = por %p93, %p94
      %p96 = scmp.ne.s32.totalorder %s87, %s88
      %p97 = scmp.eq.s32.totalorder %s35, 0
      %p98 = por %p96, %p97
      %p99 = scmp.ne.s32.totalorder %s87, %s88
      %p100 = scmp.eq.s32.totalorder %s36, 1
      %p101 = por %p99, %p100
      %p103 = scmp.ne.s32.totalorder %s88, %s102
      %p104 = scmp.eq.s32.totalorder %s36, 0
      %p105 = por %p103, %p104
      %s107 = sadd.s32 %s106, 1
      %p110 = scmp.eq.s32.totalorder %s30, 1
      %p111 = scmp.ne.s32.totalorder %s106, %s108
      %p112 = scmp.eq.s32.totalorder %s30, 0
      %p113 = por %p111, %p112
      %p114 = scmp.ne.s32.totalorder %s106, %s108
      %p115 = scmp.eq.s32.totalorder %s35, 1
      %p116 = por %p114, %p115
      %p117 = scmp.ne.s32.totalorder %s108, %s109
      %p118 = scmp.eq.s32.totalorder %s35, 0
      %p119 = por %p117, %p118
      %p120 = scmp.ne.s32.totalorder %s108, %s109
      %p121 = scmp.eq.s32.totalorder %s36, 1
      %p122 = por %p120, %p121
      %p124 = scmp.ne.s32.totalorder %s109, %s123
      %p125 = scmp.eq.s32.totalorder %s36, 0
      %p126 = por %p124, %p125
      %s128 = sadd.s32 %s127, 1
      %p131 = scmp.eq.s32.totalorder %s30, 1
      %p132 = scmp.ne.s32.totalorder %s127, %s129
      %p133 = scmp.eq.s32.totalorder %s30, 0
      %p134 = por %p132, %p133
      %p135 = scmp.ne.s32.totalorder %s127, %s129
      %p136 = scmp.eq.s32.totalorder %s35, 1
      %p137 = por %p135, %p136
      %p138 = scmp.ne.s32.totalorder %s129, %s130
      %p139 = scmp.eq.s32.totalorder %s35, 0
      %p140 = por %p138, %p139
      %p141 = scmp.ne.s32.totalorder %s129, %s130
      %p142 = scmp.eq.s32.totalorder %s36, 1
      %p143 = por %p141, %p142
      %p145 = scmp.ne.s32.totalorder %s130, %s144
      %p146 = scmp.eq.s32.totalorder %s36, 0
      %p147 = por %p145, %p146
      %s149 = sadd.s32 %s148, 1
      %p152 = scmp.eq.s32.totalorder %s30, 1
      %p153 = scmp.ne.s32.totalorder %s148, %s150
      %p154 = scmp.eq.s32.totalorder %s30, 0
      %p155 = por %p153, %p154
      %p156 = scmp.ne.s32.totalorder %s148, %s150
      %p157 = scmp.eq.s32.totalorder %s35, 1
      %p158 = por %p156, %p157
      %p159 = scmp.ne.s32.totalorder %s150, %s151
      %p160 = scmp.eq.s32.totalorder %s35, 0
      %p161 = por %p159, %p160
      %p162 = scmp.ne.s32.totalorder %s150, %s151
      %p163 = scmp.eq.s32.totalorder %s36, 1
      %p164 = por %p162, %p163
      %p166 = scmp.ne.s32.totalorder %s151, %s165
      %p167 = scmp.eq.s32.totalorder %s36, 0
      %p168 = por %p166, %p167
      %s170 = sadd.s32 %s169, 1
      %p173 = scmp.eq.s32.totalorder %s30, 1
      %p174 = scmp.ne.s32.totalorder %s169, %s171
      %p175 = scmp.eq.s32.totalorder %s30, 0
      %p176 = por %p174, %p175
      %p177 = scmp.ne.s32.totalorder %s169, %s171
      %p178 = scmp.eq.s32.totalorder %s35, 1
      %p179 = por %p177, %p178
      %p180 = scmp.ne.s32.totalorder %s171, %s172
      %p181 = scmp.eq.s32.totalorder %s35, 0
      %p182 = por %p180, %p181
      %p183 = scmp.ne.s32.totalorder %s171, %s172
      %p184 = scmp.eq.s32.totalorder %s36, 1
      %p185 = por %p183, %p184
      %p187 = scmp.ne.s32.totalorder %s172, %s186
      %p188 = scmp.eq.s32.totalorder %s36, 0
      %p189 = por %p187, %p188
      %s191 = sadd.s32 %s190, 1
      %p194 = scmp.eq.s32.totalorder %s30, 1
      %p195 = scmp.ne.s32.totalorder %s190, %s192
      %p196 = scmp.eq.s32.totalorder %s30, 0
      %p197 = por %p195, %p196
      %p198 = scmp.ne.s32.totalorder %s190, %s192
      %p199 = scmp.eq.s32.totalorder %s35, 1
      %p200 = por %p198, %p199
      %p201 = scmp.ne.s32.totalorder %s192, %s193
      %p202 = scmp.eq.s32.totalorder %s35, 0
      %p203 = por %p201, %p202
      %p204 = scmp.ne.s32.totalorder %s192, %s193
      %p205 = scmp.eq.s32.totalorder %s36, 1
      %p206 = por %p204, %p205
      %p208 = scmp.ne.s32.totalorder %s193, %s207
      %p209 = scmp.eq.s32.totalorder %s36, 0
      %p210 = por %p208, %p209
      %s212 = sadd.s32 %s211, 1
      %p215 = scmp.eq.s32.totalorder %s30, 1
      %p216 = scmp.ne.s32.totalorder %s211, %s213
      %p217 = scmp.eq.s32.totalorder %s30, 0
      %p218 = por %p216, %p217
      %p219 = scmp.ne.s32.totalorder %s211, %s213
      %p220 = scmp.eq.s32.totalorder %s35, 1
      %p221 = por %p219, %p220
      %p222 = scmp.ne.s32.totalorder %s213, %s214
      %p223 = scmp.eq.s32.totalorder %s35, 0
      %p224 = por %p222, %p223
      %p225 = scmp.ne.s32.totalorder %s213, %s214
      %p226 = scmp.eq.s32.totalorder %s36, 1
      %p227 = por %p225, %p226
      %p229 = scmp.ne.s32.totalorder %s214, %s228
      %p230 = scmp.eq.s32.totalorder %s36, 0
      %p231 = por %p229, %p230
      %s233 = sadd.s32 %s232, 1
      %p236 = scmp.eq.s32.totalorder %s30, 1
      %p237 = scmp.ne.s32.totalorder %s232, %s234
      %p238 = scmp.eq.s32.totalorder %s30, 0
      %p239 = por %p237, %p238
      %p240 = scmp.ne.s32.totalorder %s232, %s234
      %p241 = scmp.eq.s32.totalorder %s35, 1
      %p242 = por %p240, %p241
      %p243 = scmp.ne.s32.totalorder %s234, %s235
      %p244 = scmp.eq.s32.totalorder %s35, 0
      %p245 = por %p243, %p244
      %p246 = scmp.ne.s32.totalorder %s234, %s235
      %p247 = scmp.eq.s32.totalorder %s36, 1
      %p248 = por %p246, %p247
      %p250 = scmp.ne.s32.totalorder %s235, %s249
      %p251 = scmp.eq.s32.totalorder %s36, 0
      %p252 = por %p250, %p251
      %s254 = sadd.s32 %s253, 1
      %p257 = scmp.eq.s32.totalorder %s30, 1
      %p258 = scmp.ne.s32.totalorder %s253, %s255
      %p259 = scmp.eq.s32.totalorder %s30, 0
      %p260 = por %p258, %p259
      %p261 = scmp.ne.s32.totalorder %s253, %s255
      %p262 = scmp.eq.s32.totalorder %s35, 1
      %p263 = por %p261, %p262
      %p264 = scmp.ne.s32.totalorder %s255, %s256
      %p265 = scmp.eq.s32.totalorder %s35, 0
      %p266 = por %p264, %p265
      %p267 = scmp.ne.s32.totalorder %s255, %s256
      %p268 = scmp.eq.s32.totalorder %s36, 1
      %p269 = por %p267, %p268
      %p271 = scmp.ne.s32.totalorder %s256, %s270
      %p272 = scmp.eq.s32.totalorder %s36, 0
      %p273 = por %p271, %p272
      %s275 = sadd.s32 %s274, 1
      %p278 = scmp.eq.s32.totalorder %s30, 1
      %p279 = scmp.ne.s32.totalorder %s274, %s276
      %p280 = scmp.eq.s32.totalorder %s30, 0
      %p281 = por %p279, %p280
      %p282 = scmp.ne.s32.totalorder %s274, %s276
      %p283 = scmp.eq.s32.totalorder %s35, 1
      %p284 = por %p282, %p283
      %p285 = scmp.ne.s32.totalorder %s276, %s277
      %p286 = scmp.eq.s32.totalorder %s35, 0
      %p287 = por %p285, %p286
      %p288 = scmp.ne.s32.totalorder %s276, %s277
      %p289 = scmp.eq.s32.totalorder %s36, 1
      %p290 = por %p288, %p289
      %p292 = scmp.ne.s32.totalorder %s277, %s291
      %p293 = scmp.eq.s32.totalorder %s36, 0
      %p294 = por %p292, %p293
      %s296 = sadd.s32 %s295, 1
      %p299 = scmp.eq.s32.totalorder %s30, 1
      %p300 = scmp.ne.s32.totalorder %s295, %s297
      %p301 = scmp.eq.s32.totalorder %s30, 0
      %p302 = por %p300, %p301
      %p303 = scmp.ne.s32.totalorder %s295, %s297
      %p304 = scmp.eq.s32.totalorder %s35, 1
      %p305 = por %p303, %p304
      %p306 = scmp.ne.s32.totalorder %s297, %s298
      %p307 = scmp.eq.s32.totalorder %s35, 0
      %p308 = por %p306, %p307
      %p309 = scmp.ne.s32.totalorder %s297, %s298
      %p310 = scmp.eq.s32.totalorder %s36, 1
      %p311 = por %p309, %p310
      %p313 = scmp.ne.s32.totalorder %s298, %s312
      %p314 = scmp.eq.s32.totalorder %s36, 0
      %p315 = por %p313, %p314
      %s317 = sadd.s32 %s316, 1
      %p320 = scmp.eq.s32.totalorder %s30, 1
      %p321 = scmp.ne.s32.totalorder %s316, %s318
      %p322 = scmp.eq.s32.totalorder %s30, 0
      %p323 = por %p321, %p322
      %p324 = scmp.ne.s32.totalorder %s316, %s318
      %p325 = scmp.eq.s32.totalorder %s35, 1
      %p326 = por %p324, %p325
      %p327 = scmp.ne.s32.totalorder %s318, %s319
      %p328 = scmp.eq.s32.totalorder %s35, 0
      %p329 = por %p327, %p328
      %p330 = scmp.ne.s32.totalorder %s318, %s319
      %p331 = scmp.eq.s32.totalorder %s36, 1
      %p332 = por %p330, %p331
      %p334 = scmp.ne.s32.totalorder %s319, %s333
      %p335 = scmp.eq.s32.totalorder %s36, 0
      %p336 = por %p334, %p335
      %s338 = sadd.s32 %s337, 1
      %p341 = scmp.eq.s32.totalorder %s30, 1
      %p342 = scmp.ne.s32.totalorder %s337, %s339
      %p343 = scmp.eq.s32.totalorder %s30, 0
      %p344 = por %p342, %p343
      %p345 = scmp.ne.s32.totalorder %s337, %s339
      %p346 = scmp.eq.s32.totalorder %s35, 1
      %p347 = por %p345, %p346
      %p348 = scmp.ne.s32.totalorder %s339, %s340
      %p349 = scmp.eq.s32.totalorder %s35, 0
      %p350 = por %p348, %p349
      %p351 = scmp.ne.s32.totalorder %s339, %s340
      %p352 = scmp.eq.s32.totalorder %s36, 1
      %p353 = por %p351, %p352
      %p355 = scmp.ne.s32.totalorder %s340, %s354
      %p356 = scmp.eq.s32.totalorder %s36, 0
      %p357 = por %p355, %p356
      %s359 = sadd.s32 %s358, 1
      %p362 = scmp.eq.s32.totalorder %s30, 1
      %p363 = scmp.ne.s32.totalorder %s358, %s360
      %p364 = scmp.eq.s32.totalorder %s30, 0
      %p365 = por %p363, %p364
      %p366 = scmp.ne.s32.totalorder %s358, %s360
      %p367 = scmp.eq.s32.totalorder %s35, 1
      %p368 = por %p366, %p367
      %p369 = scmp.ne.s32.totalorder %s360, %s361
      %p370 = scmp.eq.s32.totalorder %s35, 0
      %p371 = por %p369, %p370
      %p372 = scmp.ne.s32.totalorder %s360, %s361
      %p373 = scmp.eq.s32.totalorder %s36, 1
      %p374 = por %p372, %p373
      %p376 = scmp.ne.s32.totalorder %s361, %s375
      %p377 = scmp.eq.s32.totalorder %s36, 0
      %p378 = por %p376, %p377
      %p379 = scmp.le.s32.totalorder 1, %s30
      %p380 = scmp.lt.s32.totalorder %s30, 3
      %p381 = pnand %p379, %p380
      %p382 = pneg %p381
      // Predicated region
      $region9: #{tpu_custom_call.1} parent=5 // pred_check
        _
      $region10: #{tpu_custom_call.1} parent=5 // pred_check_branch
        %384 = sbr.rel (%p381) target = $region12
      $region11: #{tpu_custom_call.1} parent=5 // pred_region
        %s385 = ssub.s32 %s30, 1
        // Predicated region
        $region13: #{tpu_custom_call.1} parent=11 // pred_check
          %p386 = pneg %p77
        $region14: #{tpu_custom_call.1} parent=11 // pred_check_branch
          %388 = sbr.rel (%p386) target = $region16
        $region15: #{tpu_custom_call.1} parent=11 // pred_region
          %390 = vsyncadd [#allocation9], 0
          %s391 = sshll.u32 %s1, 4
          %s392 = int_to_ptr.hbm [resolvable:$true] %s391
          %s393 = sshll.u32 [#allocation8], 4
          %s394 = int_to_ptr.vmem [resolvable:$true] %s393
          %399 = dma.hbm_to_vmem [thread:$0]  %s392, 512, %s394, [#allocation9], 128, 128, 8
        $region16: #{tpu_custom_call.1} parent=11 // pred_fallthru
          _
        // Predicated region
        $region17: #{tpu_custom_call.1} parent=11 // pred_check
          %p400 = pneg %p98
        $region18: #{tpu_custom_call.1} parent=11 // pred_check_branch
          %402 = sbr.rel (%p400) target = $region20
        $region19: #{tpu_custom_call.1} parent=11 // pred_region
          %404 = vsyncadd [#allocation9], 0
          %s406 = sshll.u32 %s2, 4
          %s407 = int_to_ptr.hbm [resolvable:$true] %s406
          %s408 = sshll.u32 [#allocation10], 4
          %s409 = int_to_ptr.vmem [resolvable:$true] %s408
          %411 = dma.hbm_to_vmem [thread:$0]  %s407, 16, %s409, [#allocation9]
        $region20: #{tpu_custom_call.1} parent=11 // pred_fallthru
          _
        // Predicated region
        $region21: #{tpu_custom_call.1} parent=11 // pred_check
          %p412 = pneg %p119
        $region22: #{tpu_custom_call.1} parent=11 // pred_check_branch
          %414 = sbr.rel (%p412) target = $region24
        $region23: #{tpu_custom_call.1} parent=11 // pred_region
          %416 = vsyncadd [#allocation12], 0
          %s418 = sshll.u32 %s3, 4
          %s419 = int_to_ptr.hbm [resolvable:$true] %s418
          %s420 = sshll.u32 [#allocation11], 4
          %s421 = int_to_ptr.vmem [resolvable:$true] %s420
          %423 = dma.hbm_to_vmem [thread:$0]  %s419, 16, %s421, [#allocation12]
        $region24: #{tpu_custom_call.1} parent=11 // pred_fallthru
          _
        // Predicated region
        $region25: #{tpu_custom_call.1} parent=11 // pred_check
          %p424 = pneg %p140
        $region26: #{tpu_custom_call.1} parent=11 // pred_check_branch
          %426 = sbr.rel (%p424) target = $region28
        $region27: #{tpu_custom_call.1} parent=11 // pred_region
          %428 = vsyncadd [#allocation12], 0
          %s430 = sshll.u32 %s4, 4
          %s431 = int_to_ptr.hbm [resolvable:$true] %s430
          %s432 = sshll.u32 [#allocation13], 4
          %s433 = int_to_ptr.vmem [resolvable:$true] %s432
          %435 = dma.hbm_to_vmem [thread:$0]  %s431, 16, %s433, [#allocation12]
        $region28: #{tpu_custom_call.1} parent=11 // pred_fallthru
          _
        // Predicated region
        $region29: #{tpu_custom_call.1} parent=11 // pred_check
          %p436 = pneg %p161
        $region30: #{tpu_custom_call.1} parent=11 // pred_check_branch
          %438 = sbr.rel (%p436) target = $region32
        $region31: #{tpu_custom_call.1} parent=11 // pred_region
          %440 = vsyncadd [#allocation15], 0
          %s441 = sshll.u32 %s5, 4
          %s442 = int_to_ptr.hbm [resolvable:$true] %s441
          %s443 = sshll.u32 [#allocation14], 4
          %s444 = int_to_ptr.vmem [resolvable:$true] %s443
          %449 = dma.hbm_to_vmem [thread:$0]  %s442, 6144, %s444, [#allocation15], 128, 128, 8
        $region32: #{tpu_custom_call.1} parent=11 // pred_fallthru
          _
        // Predicated region
        $region33: #{tpu_custom_call.1} parent=11 // pred_check
          %p450 = pneg %p182
        $region34: #{tpu_custom_call.1} parent=11 // pred_check_branch
          %452 = sbr.rel (%p450) target = $region36
        $region35: #{tpu_custom_call.1} parent=11 // pred_region
          _
        $region36: #{tpu_custom_call.1} parent=11 // pred_fallthru
          _
        // Predicated region
        $region37: #{tpu_custom_call.1} parent=11 // pred_check
          %p453 = pneg %p203
        $region38: #{tpu_custom_call.1} parent=11 // pred_check_branch
          %455 = sbr.rel (%p453) target = $region40
        $region39: #{tpu_custom_call.1} parent=11 // pred_region
          _
        $region40: #{tpu_custom_call.1} parent=11 // pred_fallthru
          _
        // Predicated region
        $region41: #{tpu_custom_call.1} parent=11 // pred_check
          %p456 = pneg %p224
        $region42: #{tpu_custom_call.1} parent=11 // pred_check_branch
          %458 = sbr.rel (%p456) target = $region44
        $region43: #{tpu_custom_call.1} parent=11 // pred_region
          %460 = vsyncadd [#allocation15], 0
          %s461 = sshll.u32 %s8, 4
          %s462 = int_to_ptr.hbm [resolvable:$true] %s461
          %s463 = sshll.u32 [#allocation16], 4
          %s464 = int_to_ptr.vmem [resolvable:$true] %s463
          %469 = dma.hbm_to_vmem [thread:$0]  %s462, 6144, %s464, [#allocation15], 128, 128, 8
        $region44: #{tpu_custom_call.1} parent=11 // pred_fallthru
          _
        // Predicated region
        $region45: #{tpu_custom_call.1} parent=11 // pred_check
          %p470 = pneg %p245
        $region46: #{tpu_custom_call.1} parent=11 // pred_check_branch
          %472 = sbr.rel (%p470) target = $region48
        $region47: #{tpu_custom_call.1} parent=11 // pred_region
          %474 = vsyncadd [#allocation18], 0
          %s475 = sshll.u32 %s9, 4
          %s476 = int_to_ptr.hbm [resolvable:$true] %s475
          %s477 = sshll.u32 [#allocation17], 4
          %s478 = int_to_ptr.vmem [resolvable:$true] %s477
          %483 = dma.hbm_to_vmem [thread:$0]  %s476, 48, %s478, [#allocation18], 16, 16, 1
        $region48: #{tpu_custom_call.1} parent=11 // pred_fallthru
          _
        // Predicated region
        $region49: #{tpu_custom_call.1} parent=11 // pred_check
          %p484 = pneg %p266
        $region50: #{tpu_custom_call.1} parent=11 // pred_check_branch
          %486 = sbr.rel (%p484) target = $region52
        $region51: #{tpu_custom_call.1} parent=11 // pred_region
          _
        $region52: #{tpu_custom_call.1} parent=11 // pred_fallthru
          _
        // Predicated region
        $region53: #{tpu_custom_call.1} parent=11 // pred_check
          %p487 = pneg %p287
        $region54: #{tpu_custom_call.1} parent=11 // pred_check_branch
          %489 = sbr.rel (%p487) target = $region56
        $region55: #{tpu_custom_call.1} parent=11 // pred_region
          %491 = vsyncadd [#allocation18], 0
          %s492 = sshll.u32 %s11, 4
          %s493 = int_to_ptr.hbm [resolvable:$true] %s492
          %s494 = sshll.u32 [#allocation19], 4
          %s495 = int_to_ptr.vmem [resolvable:$true] %s494
          %500 = dma.hbm_to_vmem [thread:$0]  %s493, 2048, %s495, [#allocation18], 128, 128, 8
        $region56: #{tpu_custom_call.1} parent=11 // pred_fallthru
          _
        // Predicated region
        $region57: #{tpu_custom_call.1} parent=11 // pred_check
          %p501 = pneg %p308
        $region58: #{tpu_custom_call.1} parent=11 // pred_check_branch
          %503 = sbr.rel (%p501) target = $region60
        $region59: #{tpu_custom_call.1} parent=11 // pred_region
          _
        $region60: #{tpu_custom_call.1} parent=11 // pred_fallthru
          _
        // Predicated region
        $region61: #{tpu_custom_call.1} parent=11 // pred_check
          %p504 = pneg %p329
        $region62: #{tpu_custom_call.1} parent=11 // pred_check_branch
          %506 = sbr.rel (%p504) target = $region64
        $region63: #{tpu_custom_call.1} parent=11 // pred_region
          %508 = vsyncadd [#allocation21], 0
          %s509 = sshll.u32 %s13, 4
          %s510 = int_to_ptr.hbm [resolvable:$true] %s509
          %s511 = sshll.u32 [#allocation20], 4
          %s512 = int_to_ptr.vmem [resolvable:$true] %s511
          %517 = dma.hbm_to_vmem [thread:$0]  %s510, 2048, %s512, [#allocation21], 128, 128, 8
        $region64: #{tpu_custom_call.1} parent=11 // pred_fallthru
          _
        // Predicated region
        $region65: #{tpu_custom_call.1} parent=11 // pred_check
          %p518 = pneg %p350
        $region66: #{tpu_custom_call.1} parent=11 // pred_check_branch
          %520 = sbr.rel (%p518) target = $region68
        $region67: #{tpu_custom_call.1} parent=11 // pred_region
          _
        $region68: #{tpu_custom_call.1} parent=11 // pred_fallthru
          _
      $region12: #{tpu_custom_call.1} parent=5 // pred_fallthru
        _
      %p521 = scmp.lt.s32.totalorder %s30, 2
      // Predicated region
      $region69: #{tpu_custom_call.1} parent=5 // pred_check
        %p522 = pneg %p521
      $region70: #{tpu_custom_call.1} parent=5 // pred_check_branch
        %524 = sbr.rel (%p522) target = $region72
      $region71: #{tpu_custom_call.1} parent=5 // pred_region
        // Predicated region
        $region73: #{tpu_custom_call.1} parent=71 // pred_check
          %p525 = pneg %p50
        $region74: #{tpu_custom_call.1} parent=71 // pred_check_branch
          %527 = sbr.rel (%p525) target = $region76
        $region75: #{tpu_custom_call.1} parent=71 // pred_region
          %s528 = sand.u32 %s40, 1
          %s529 = scalar_lea.sflag [#allocation6], %s528
          %s530 = sand.u32 %s40, 1
          %s531 = smul.addr %s530, 16
          %s532 = scalar_lea.vmem [#allocation5], %s531
          %s533 = smul.u32 2, %s30
          %535 = vsyncadd %s529, 0
          %s536 = smul.addr %s533, 8
          %s537 = scalar_lea.hbm %s0, %s536
          %s538 = sshll.u32 %s537, 4
          %s539 = int_to_ptr.hbm [resolvable:$true] %s538
          %s540 = sshll.u32 %s532, 4
          %s541 = int_to_ptr.vmem [resolvable:$true] %s540
          %546 = dma.hbm_to_vmem [thread:$0]  %s539, 256, %s541, %s529, 128, 128, 8
        $region76: #{tpu_custom_call.1} parent=71 // pred_fallthru
          _
      $region72: #{tpu_custom_call.1} parent=5 // pred_fallthru
        _
      %p547 = scmp.le.s32.totalorder 1, %s30
      %p548 = scmp.lt.s32.totalorder %s30, 3
      %p549 = pnand %p547, %p548
      %p550 = pneg %p549
      // Predicated region
      $region77: #{tpu_custom_call.1} parent=5 // pred_check
        _
      $region78: #{tpu_custom_call.1} parent=5 // pred_check_branch
        %552 = sbr.rel (%p549) target = $region80
      $region79: #{tpu_custom_call.1} parent=5 // pred_region
        %s553 = ssub.s32 %s30, 1
        %s554 = sand.u32 %s43, 1
        %s555 = scalar_lea.sflag [#allocation6], %s554
        %s556 = sand.u32 %s43, 1
        %s557 = smul.addr %s556, 16
        %s558 = scalar_lea.vmem [#allocation5], %s557
        // Predicated region
        $region81: #{tpu_custom_call.1} parent=79 // pred_check
          %p559 = pneg %p56
        $region82: #{tpu_custom_call.1} parent=79 // pred_check_branch
          %561 = sbr.rel (%p559) target = $region84
        $region83: #{tpu_custom_call.1} parent=79 // pred_region
          %563 = dma.done %s555, 256
        $region84: #{tpu_custom_call.1} parent=79 // pred_fallthru
          _
        // Predicated region
        $region85: #{tpu_custom_call.1} parent=79 // pred_check
          %p564 = pneg %p77
        $region86: #{tpu_custom_call.1} parent=79 // pred_check_branch
          %566 = sbr.rel (%p564) target = $region88
        $region87: #{tpu_custom_call.1} parent=79 // pred_region
          %568 = dma.done [#allocation9], 512
        $region88: #{tpu_custom_call.1} parent=79 // pred_fallthru
          _
        // Predicated region
        $region89: #{tpu_custom_call.1} parent=79 // pred_check
          %p569 = pneg %p98
        $region90: #{tpu_custom_call.1} parent=79 // pred_check_branch
          %571 = sbr.rel (%p569) target = $region92
        $region91: #{tpu_custom_call.1} parent=79 // pred_region
          %573 = dma.done [#allocation9], 16
        $region92: #{tpu_custom_call.1} parent=79 // pred_fallthru
          _
        // Predicated region
        $region93: #{tpu_custom_call.1} parent=79 // pred_check
          %p574 = pneg %p119
        $region94: #{tpu_custom_call.1} parent=79 // pred_check_branch
          %576 = sbr.rel (%p574) target = $region96
        $region95: #{tpu_custom_call.1} parent=79 // pred_region
          %578 = dma.done [#allocation12], 16
        $region96: #{tpu_custom_call.1} parent=79 // pred_fallthru
          _
        // Predicated region
        $region97: #{tpu_custom_call.1} parent=79 // pred_check
          %p579 = pneg %p140
        $region98: #{tpu_custom_call.1} parent=79 // pred_check_branch
          %581 = sbr.rel (%p579) target = $region100
        $region99: #{tpu_custom_call.1} parent=79 // pred_region
          %583 = dma.done [#allocation12], 16
        $region100: #{tpu_custom_call.1} parent=79 // pred_fallthru
          _
        // Predicated region
        $region101: #{tpu_custom_call.1} parent=79 // pred_check
          %p584 = pneg %p161
        $region102: #{tpu_custom_call.1} parent=79 // pred_check_branch
          %586 = sbr.rel (%p584) target = $region104
        $region103: #{tpu_custom_call.1} parent=79 // pred_region
          %588 = dma.done [#allocation15], 6144
        $region104: #{tpu_custom_call.1} parent=79 // pred_fallthru
          _
        // Predicated region
        $region105: #{tpu_custom_call.1} parent=79 // pred_check
          %p589 = pneg %p224
        $region106: #{tpu_custom_call.1} parent=79 // pred_check_branch
          %591 = sbr.rel (%p589) target = $region108
        $region107: #{tpu_custom_call.1} parent=79 // pred_region
          %593 = dma.done [#allocation15], 6144
        $region108: #{tpu_custom_call.1} parent=79 // pred_fallthru
          _
        // Predicated region
        $region109: #{tpu_custom_call.1} parent=79 // pred_check
          %p594 = pneg %p245
        $region110: #{tpu_custom_call.1} parent=79 // pred_check_branch
          %596 = sbr.rel (%p594) target = $region112
        $region111: #{tpu_custom_call.1} parent=79 // pred_region
          %598 = dma.done [#allocation18], 48
        $region112: #{tpu_custom_call.1} parent=79 // pred_fallthru
          _
        // Predicated region
        $region113: #{tpu_custom_call.1} parent=79 // pred_check
          %p599 = pneg %p287
        $region114: #{tpu_custom_call.1} parent=79 // pred_check_branch
          %601 = sbr.rel (%p599) target = $region116
        $region115: #{tpu_custom_call.1} parent=79 // pred_region
          %603 = dma.done [#allocation18], 2048
        $region116: #{tpu_custom_call.1} parent=79 // pred_fallthru
          _
        // Predicated region
        $region117: #{tpu_custom_call.1} parent=79 // pred_check
          %p604 = pneg %p329
        $region118: #{tpu_custom_call.1} parent=79 // pred_check_branch
          %606 = sbr.rel (%p604) target = $region120
        $region119: #{tpu_custom_call.1} parent=79 // pred_region
          %608 = dma.done [#allocation21], 2048
        $region120: #{tpu_custom_call.1} parent=79 // pred_fallthru
          _
        %s609 = sand.u32 %s43, 1
        %s610 = scalar_lea.sflag [#allocation6], %s609
        %s611 = sand.u32 %s43, 1
        %s612 = smul.addr %s611, 16
        %s613 = scalar_lea.vmem [#allocation5], %s612
        %p614 = pneg %p56
        %p615 = pneg %p53
        %p616 = pneg %p77
        %p617 = pneg %p74
        %p618 = pneg %p98
        %p619 = pneg %p95
        %p620 = pneg %p119
        %p621 = pneg %p116
        %p622 = pneg %p140
        %p623 = pneg %p137
        %p624 = pneg %p161
        %p625 = pneg %p158
        %p626 = pneg %p182
        %p627 = pneg %p179
        %p628 = pneg %p203
        %p629 = pneg %p200
        %p630 = pneg %p224
        %p631 = pneg %p221
        %p632 = pneg %p245
        %p633 = pneg %p242
        %p634 = pneg %p266
        %p635 = pneg %p263
        %p636 = pneg %p287
        %p637 = pneg %p284
        %p638 = pneg %p308
        %p639 = pneg %p305
        %p640 = pneg %p329
        %p641 = pneg %p326
        %p642 = pneg %p350
        %p643 = pneg %p347
        %p644 = pneg %p371
        %p645 = pneg %p368
        %s646 = smul.u32 2, %s35
        %p647 = scmp.eq.s32.totalorder %s35, 0
        // Predicated region
        $region121: #{tpu_custom_call.1} parent=79 // pred_check
          %p648 = pneg %p647
        $region122: #{tpu_custom_call.1} parent=79 // pred_check_branch
          %650 = sbr.rel (%p648) target = $region124
        $region123: #{tpu_custom_call.1} parent=79 // pred_region
          %651 = vst [vmem:[#allocation3] sm:$0x1] 0.0
          %652 = vst [vmem:[#allocation4] sm:$0x1] 0.0
        $region124: #{tpu_custom_call.1} parent=79 // pred_fallthru
          _
        %v653 = vld [vmem:[%s558] sm:$0xff]
        %v654 = vld [vmem:[%s558 + $0x8] sm:$0xff]
        %v655 = vld [vmem:[#allocation8] sm:$0xff]
        %v656 = vld [vmem:[#allocation8 + $0x8] sm:$0xff]
        %v657 = vld [vmem:[#allocation8 + $0x10] sm:$0xff]
        %v658 = vld [vmem:[#allocation8 + $0x18] sm:$0xff]
        %v659 = vld [vmem:[#allocation10] sm:$0x1]
        %v661 = vperm.slane %v659, 0
        %vm663 = vcmask 261120
        %v665 = vsel %vm663, %v653, 0
        %v668 = vsel %vm663, %v654, 0
        %670 = vmatpush.msra.mxu0 0.0
        %671 = vmatpush.msra.mxu0 0.0
        %672 = vmatpush.msra.mxu0 0.0
        %673 = vmatpush.msra.mxu0 0.0
        %674 = vmatpush.msra.mxu0 0.0
        %675 = vmatpush.msra.mxu0 0.0
        %676 = vmatpush.msra.mxu0 0.0
        %677 = vmatpush.msra.mxu0 0.0
        %678 = vmatpush.msra.mxu0 0.0
        %679 = vmatpush.msra.mxu0 0.0
        %680 = vmatpush.msra.mxu0 0.0
        %681 = vmatpush.msra.mxu0 0.0
        %682 = vmatpush.msra.mxu0 %v658
        %683 = vmatpush.msra.mxu0 %v657
        %684 = vmatpush.msra.mxu0 %v656
        %685 = vmatpush.msra.mxu0 %v655
        %686 = vmatmul.f32.gmra.mxu0 %v665
        %v687 = vpop.f32.mrf.mxu0
        %v688 = vadd.f32 %v661, %v687
        %689 = vmatmul.f32.gmra.mxu0 %v668
        %v690 = vpop.f32.mrf.mxu0
        %v691 = vadd.f32 %v661, %v690
        %692 = vdwg.mxu0
        %v693 = vmax.f32 %v688, 0.0
        %v694 = vmax.f32 %v691, 0.0
        %s695 = smul.u32 %s35, 16
        %v696 = vlaneseq
        %v697 = vshrl.u32 %v696, 7
        %v698 = vadd.s32 %v697, 8
        %v699 = vstv %s695
        %v700 = vadd.s32 %v699, %v697
        %v701 = vadd.s32 %v699, %v698
        %vm702 = vcmp.lt.s32.totalorder %v700, 24
        %vm703 = vcmp.lt.s32.totalorder %v701, 24
        %v704 = vsel %vm702, 1, 0
        %v705 = vsel %vm703, 1, 0
        %v706 = vcvt.s32.f32 %v704
        %v707 = vcvt.s32.f32 %v705
        %v708 = vmul.f32 %v693, %v706
        %v709 = vmul.f32 %v694, %v707
        %v710 = vld [vmem:[#allocation3] sm:$0x1]
        %v711 = vadd.f32 %v708, %v709
        %v712 = vrot.slane %v711, 4
        %v713 = vadd.f32 %v711, %v712
        %v714 = vrot.slane %v713, 2
        %v715 = vadd.f32 %v713, %v714
        %v716 = vrot.slane %v715, 1
        %v717 = vadd.f32 %v715, %v716
        %v718 = vadd.f32 %v710, %v717
        %719 = vst [vmem:[#allocation3] sm:$0x1] %v718
        %v720 = vld [vmem:[#allocation4] sm:$0x1]
        %v721 = vmul.f32 %v708, %v708
        %v722 = vmul.f32 %v709, %v709
        %v723 = vadd.f32 %v721, %v722
        %v724 = vrot.slane %v723, 4
        %v725 = vadd.f32 %v723, %v724
        %v726 = vrot.slane %v725, 2
        %v727 = vadd.f32 %v725, %v726
        %v728 = vrot.slane %v727, 1
        %v729 = vadd.f32 %v727, %v728
        %v730 = vadd.f32 %v720, %v729
        %731 = vst [vmem:[#allocation4] sm:$0x1] %v730
        %s732 = scalar_lea.vmem [#allocation2], %s695
        %733 = vst [vmem:[%s732] sm:$0xff] %v708
        %734 = vst [vmem:[%s732 + $0x8] sm:$0xff] %v709
        %p735 = scmp.eq.s32.totalorder %s35, 1
        // Predicated region
        $region125: #{tpu_custom_call.1} parent=79 // pred_check
          %p736 = pneg %p735
        $region126: #{tpu_custom_call.1} parent=79 // pred_check_branch
          %738 = sbr.rel (%p736) target = $region128
        $region127: #{tpu_custom_call.1} parent=79 // pred_region
          %v739 = vadd.s32 %v697, 16
          %v740 = vadd.s32 %v697, 24
          %vm741 = vcmp.lt.s32.totalorder %v697, 24
          %vm742 = vcmp.lt.s32.totalorder %v698, 24
          %vm743 = vcmp.lt.s32.totalorder %v739, 24
          %vm744 = vcmp.lt.s32.totalorder %v740, 24
          %v745 = vsel %vm741, 1, 0
          %v746 = vsel %vm742, 1, 0
          %v747 = vsel %vm743, 1, 0
          %v748 = vsel %vm744, 1, 0
          %v749 = vcvt.s32.f32 %v745
          %v750 = vcvt.s32.f32 %v746
          %v751 = vcvt.s32.f32 %v747
          %v752 = vcvt.s32.f32 %v748
          %v753 = vld [vmem:[#allocation3] sm:$0x1]
          %v754 = vmul.f32 %v753, 0.041666668
          %v755 = vld [vmem:[#allocation4] sm:$0x1]
          %v756 = vmul.f32 %v755, 0.041666668
          %v757 = vmul.f32 %v754, %v754
          %v758 = vsub.f32 %v756, %v757
          %v759 = vmax.f32 %v758, 0.0
          %v760 = vld [vmem:[#allocation11] sm:$0x1]
          %v761 = vadd.f32 %v759, 1e-05
          %v762 = vrsqrt.pop %v761
          %v763 = vmul.f32 %v762, %v761
          %v764 = vmul.f32 %v763, %v762
          %v765 = vmul.f32 0.5, %v764
          %v766 = vsub.f32 1.5, %v765
          %v767 = vmul.f32 %v762, %v766
          %vm768 = vweird.f32 %v761
          %vm769 = vweird.f32 %v762
          %vm770 = vmor %vm768, %vm769
          %v771 = vsel %vm770, %v762, %v767
          %v772 = vmul.f32 %v760, %v771
          %v773 = vld [vmem:[#allocation2] sm:$0xff]
          %v774 = vld [vmem:[#allocation2 + $0x8] sm:$0xff]
          %v775 = vld [vmem:[#allocation2 + $0x10] sm:$0xff]
          %v776 = vld [vmem:[#allocation2 + $0x18] sm:$0xff]
          %v778 = vperm.slane %v772, 0
          %v780 = vmul.f32 %v773, %v778
          %v781 = vmul.f32 %v774, %v778
          %v782 = vmul.f32 %v775, %v778
          %v783 = vmul.f32 %v776, %v778
          %v784 = vld [vmem:[#allocation13] sm:$0x1]
          %v785 = vmul.f32 %v754, %v772
          %v786 = vsub.f32 %v784, %v785
          %v788 = vperm.slane %v786, 0
          %v790 = vadd.f32 %v780, %v788
          %v791 = vadd.f32 %v781, %v788
          %v792 = vadd.f32 %v782, %v788
          %v793 = vadd.f32 %v783, %v788
          %794 = vst [vmem:[#allocation2] sm:$0xff] %v790
          %795 = vst [vmem:[#allocation2 + $0x8] sm:$0xff] %v791
          %796 = vst [vmem:[#allocation2 + $0x10] sm:$0xff] %v792
          %797 = vst [vmem:[#allocation2 + $0x18] sm:$0xff] %v793
          %v798 = vld [vmem:[#allocation2] sm:$0xff]
          %v799 = vld [vmem:[#allocation2 + $0x8] sm:$0xff]
          %v800 = vld [vmem:[#allocation2 + $0x10] sm:$0xff]
          %v801 = vld [vmem:[#allocation2 + $0x18] sm:$0xff]
          %v802 = vld [vmem:[#allocation14] sm:$0xff]
          %v803 = vld [vmem:[#allocation14 + $0x8] sm:$0xff]
          %v804 = vld [vmem:[#allocation14 + $0x10] sm:$0xff]
          %v805 = vld [vmem:[#allocation14 + $0x18] sm:$0xff]
          %v806 = vld [vmem:[#allocation14 + $0x20] sm:$0xff]
          %v807 = vld [vmem:[#allocation14 + $0x28] sm:$0xff]
          %v808 = vld [vmem:[#allocation14 + $0x30] sm:$0xff]
          %v809 = vld [vmem:[#allocation14 + $0x38] sm:$0xff]
          %v810 = vld [vmem:[#allocation14 + $0x40] sm:$0xff]
          %v811 = vld [vmem:[#allocation14 + $0x48] sm:$0xff]
          %v812 = vld [vmem:[#allocation14 + $0x50] sm:$0xff]
          %v813 = vld [vmem:[#allocation14 + $0x58] sm:$0xff]
          %v814 = vld [vmem:[#allocation14 + $0x60] sm:$0xff]
          %v815 = vld [vmem:[#allocation14 + $0x68] sm:$0xff]
          %v816 = vld [vmem:[#allocation14 + $0x70] sm:$0xff]
          %v817 = vld [vmem:[#allocation14 + $0x78] sm:$0xff]
          %818 = vmatpush.msra.mxu0 %v817
          %819 = vmatpush.msra.mxu0 %v816
          %820 = vmatpush.msra.mxu0 %v815
          %821 = vmatpush.msra.mxu0 %v814
          %822 = vmatpush.msra.mxu0 %v813
          %823 = vmatpush.msra.mxu0 %v812
          %824 = vmatpush.msra.mxu0 %v811
          %825 = vmatpush.msra.mxu0 %v810
          %826 = vmatpush.msra.mxu0 %v809
          %827 = vmatpush.msra.mxu0 %v808
          %828 = vmatpush.msra.mxu0 %v807
          %829 = vmatpush.msra.mxu0 %v806
          %830 = vmatpush.msra.mxu0 %v805
          %831 = vmatpush.msra.mxu0 %v804
          %832 = vmatpush.msra.mxu0 %v803
          %833 = vmatpush.msra.mxu0 %v802
          %834 = vmatmul.f32.gmra.mxu0 %v798
          %v835 = vpop.f32.mrf.mxu0
          %v836 = vadd.f32 0.0, %v835
          %837 = vmatmul.f32.gmra.mxu0 %v799
          %v838 = vpop.f32.mrf.mxu0
          %v839 = vadd.f32 0.0, %v838
          %840 = vmatmul.f32.gmra.mxu0 %v800
          %v841 = vpop.f32.mrf.mxu0
          %v842 = vadd.f32 0.0, %v841
          %843 = vmatmul.f32.gmra.mxu0 %v801
          %v844 = vpop.f32.mrf.mxu0
          %v845 = vadd.f32 0.0, %v844
          %846 = vdwg.mxu0
          %v847 = vld [vmem:[%s6] sm:$0x1]
          %v848 = vld [vmem:[%s7] sm:$0x1]
          %v849 = vmul.f32 %v836, %v749
          %v850 = vmul.f32 %v839, %v750
          %v851 = vmul.f32 %v842, %v751
          %v852 = vmul.f32 %v845, %v752
          %v853 = vadd.f32 %v849, %v850
          %v854 = vadd.f32 %v853, %v851
          %v855 = vadd.f32 %v854, %v852
          %v856 = vrot.slane %v855, 4
          %v857 = vadd.f32 %v855, %v856
          %v858 = vrot.slane %v857, 2
          %v859 = vadd.f32 %v857, %v858
          %v860 = vrot.slane %v859, 1
          %v861 = vadd.f32 %v859, %v860
          %v862 = vmul.f32 %v849, %v849
          %v863 = vmul.f32 %v850, %v850
          %v864 = vmul.f32 %v851, %v851
          %v865 = vmul.f32 %v852, %v852
          %v866 = vadd.f32 %v862, %v863
          %v867 = vadd.f32 %v866, %v864
          %v868 = vadd.f32 %v867, %v865
          %v869 = vrot.slane %v868, 4
          %v870 = vadd.f32 %v868, %v869
          %v871 = vrot.slane %v870, 2
          %v872 = vadd.f32 %v870, %v871
          %v873 = vrot.slane %v872, 1
          %v874 = vadd.f32 %v872, %v873
          %v875 = vmul.f32 %v861, 0.041666668
          %v876 = vmul.f32 %v874, 0.041666668
          %v877 = vmul.f32 %v875, %v875
          %v878 = vsub.f32 %v876, %v877
          %v879 = vmax.f32 %v878, 0.0
          %v880 = vadd.f32 %v879, 1e-05
          %v881 = vrsqrt.pop %v880
          %v882 = vmul.f32 %v881, %v880
          %v883 = vmul.f32 %v882, %v881
          %v884 = vmul.f32 0.5, %v883
          %v885 = vsub.f32 1.5, %v884
          %v886 = vmul.f32 %v881, %v885
          %vm887 = vweird.f32 %v880
          %vm888 = vweird.f32 %v881
          %vm889 = vmor %vm887, %vm888
          %v890 = vsel %vm889, %v881, %v886
          %v891 = vmul.f32 %v847, %v890
          %v893 = vperm.slane %v891, 0
          %v895 = vmul.f32 %v836, %v893
          %v896 = vmul.f32 %v839, %v893
          %v897 = vmul.f32 %v842, %v893
          %v898 = vmul.f32 %v845, %v893
          %v899 = vmul.f32 %v875, %v891
          %v900 = vsub.f32 %v848, %v899
          %v902 = vperm.slane %v900, 0
          %v904 = vadd.f32 %v895, %v902
          %v905 = vadd.f32 %v896, %v902
          %v906 = vadd.f32 %v897, %v902
          %v907 = vadd.f32 %v898, %v902
          %v908 = vmax.f32 %v904, 0.0
          %v909 = vmax.f32 %v905, 0.0
          %v910 = vmax.f32 %v906, 0.0
          %v911 = vmax.f32 %v907, 0.0
          %v912 = vld [vmem:[#allocation16] sm:$0xff]
          %v913 = vld [vmem:[#allocation16 + $0x8] sm:$0xff]
          %v914 = vld [vmem:[#allocation16 + $0x10] sm:$0xff]
          %v915 = vld [vmem:[#allocation16 + $0x18] sm:$0xff]
          %v916 = vld [vmem:[#allocation16 + $0x20] sm:$0xff]
          %v917 = vld [vmem:[#allocation16 + $0x28] sm:$0xff]
          %v918 = vld [vmem:[#allocation16 + $0x30] sm:$0xff]
          %v919 = vld [vmem:[#allocation16 + $0x38] sm:$0xff]
          %v920 = vld [vmem:[#allocation16 + $0x40] sm:$0xff]
          %v921 = vld [vmem:[#allocation16 + $0x48] sm:$0xff]
          %v922 = vld [vmem:[#allocation16 + $0x50] sm:$0xff]
          %v923 = vld [vmem:[#allocation16 + $0x58] sm:$0xff]
          %v924 = vld [vmem:[#allocation16 + $0x60] sm:$0xff]
          %v925 = vld [vmem:[#allocation16 + $0x68] sm:$0xff]
          %v926 = vld [vmem:[#allocation16 + $0x70] sm:$0xff]
          %v927 = vld [vmem:[#allocation16 + $0x78] sm:$0xff]
          %928 = vmatpush.msra.mxu0 %v927
          %929 = vmatpush.msra.mxu0 %v926
          %930 = vmatpush.msra.mxu0 %v925
          %931 = vmatpush.msra.mxu0 %v924
          %932 = vmatpush.msra.mxu0 %v923
          %933 = vmatpush.msra.mxu0 %v922
          %934 = vmatpush.msra.mxu0 %v921
          %935 = vmatpush.msra.mxu0 %v920
          %936 = vmatpush.msra.mxu0 %v919
          %937 = vmatpush.msra.mxu0 %v918
          %938 = vmatpush.msra.mxu0 %v917
          %939 = vmatpush.msra.mxu0 %v916
          %940 = vmatpush.msra.mxu0 %v915
          %941 = vmatpush.msra.mxu0 %v914
          %942 = vmatpush.msra.mxu0 %v913
          %943 = vmatpush.msra.mxu0 %v912
          %944 = vmatmul.f32.gmra.mxu0 %v908
          %v945 = vpop.f32.mrf.mxu0
          %v946 = vadd.f32 0.0, %v945
          %947 = vmatmul.f32.gmra.mxu0 %v909
          %v948 = vpop.f32.mrf.mxu0
          %v949 = vadd.f32 0.0, %v948
          %950 = vmatmul.f32.gmra.mxu0 %v910
          %v951 = vpop.f32.mrf.mxu0
          %v952 = vadd.f32 0.0, %v951
          %953 = vmatmul.f32.gmra.mxu0 %v911
          %v954 = vpop.f32.mrf.mxu0
          %v955 = vadd.f32 0.0, %v954
          %956 = vdwg.mxu0
          %v957 = vld [vmem:[#allocation17] sm:$0x1]
          %v958 = vld [vmem:[%s10] sm:$0x1]
          %v959 = vmul.f32 %v946, %v749
          %v960 = vmul.f32 %v949, %v750
          %v961 = vmul.f32 %v952, %v751
          %v962 = vmul.f32 %v955, %v752
          %v963 = vadd.f32 %v959, %v960
          %v964 = vadd.f32 %v963, %v961
          %v965 = vadd.f32 %v964, %v962
          %v966 = vrot.slane %v965, 4
          %v967 = vadd.f32 %v965, %v966
          %v968 = vrot.slane %v967, 2
          %v969 = vadd.f32 %v967, %v968
          %v970 = vrot.slane %v969, 1
          %v971 = vadd.f32 %v969, %v970
          %v972 = vmul.f32 %v959, %v959
          %v973 = vmul.f32 %v960, %v960
          %v974 = vmul.f32 %v961, %v961
          %v975 = vmul.f32 %v962, %v962
          %v976 = vadd.f32 %v972, %v973
          %v977 = vadd.f32 %v976, %v974
          %v978 = vadd.f32 %v977, %v975
          %v979 = vrot.slane %v978, 4
          %v980 = vadd.f32 %v978, %v979
          %v981 = vrot.slane %v980, 2
          %v982 = vadd.f32 %v980, %v981
          %v983 = vrot.slane %v982, 1
          %v984 = vadd.f32 %v982, %v983
          %v985 = vmul.f32 %v971, 0.041666668
          %v986 = vmul.f32 %v984, 0.041666668
          %v987 = vmul.f32 %v985, %v985
          %v988 = vsub.f32 %v986, %v987
          %v989 = vmax.f32 %v988, 0.0
          %v990 = vadd.f32 %v989, 1e-05
          %v991 = vrsqrt.pop %v990
          %v992 = vmul.f32 %v991, %v990
          %v993 = vmul.f32 %v992, %v991
          %v994 = vmul.f32 0.5, %v993
          %v995 = vsub.f32 1.5, %v994
          %v996 = vmul.f32 %v991, %v995
          %vm997 = vweird.f32 %v990
          %vm998 = vweird.f32 %v991
          %vm999 = vmor %vm997, %vm998
          %v1000 = vsel %vm999, %v991, %v996
          %v1001 = vmul.f32 %v957, %v1000
          %v1003 = vperm.slane %v1001, 0
          %v1005 = vmul.f32 %v946, %v1003
          %v1006 = vmul.f32 %v949, %v1003
          %v1007 = vmul.f32 %v952, %v1003
          %v1008 = vmul.f32 %v955, %v1003
          %v1009 = vmul.f32 %v985, %v1001
          %v1010 = vsub.f32 %v958, %v1009
          %v1012 = vperm.slane %v1010, 0
          %v1014 = vadd.f32 %v1005, %v1012
          %v1015 = vadd.f32 %v1006, %v1012
          %v1016 = vadd.f32 %v1007, %v1012
          %v1017 = vadd.f32 %v1008, %v1012
          %v1018 = vadd.f32 %v798, %v1014
          %v1019 = vadd.f32 %v799, %v1015
          %v1020 = vadd.f32 %v800, %v1016
          %v1021 = vadd.f32 %v801, %v1017
          %v1022 = vmax.f32 %v1018, 0.0
          %v1023 = vmax.f32 %v1019, 0.0
          %v1024 = vmax.f32 %v1020, 0.0
          %v1025 = vmax.f32 %v1021, 0.0
          %1026 = vst [vmem:[#allocation2] sm:$0xff] %v1022
          %1027 = vst [vmem:[#allocation2 + $0x8] sm:$0xff] %v1023
          %1028 = vst [vmem:[#allocation2 + $0x10] sm:$0xff] %v1024
          %1029 = vst [vmem:[#allocation2 + $0x18] sm:$0xff] %v1025
          %v1030 = vld [vmem:[#allocation2] sm:$0xff]
          %v1031 = vld [vmem:[#allocation2 + $0x8] sm:$0xff]
          %v1032 = vld [vmem:[#allocation2 + $0x10] sm:$0xff]
          %v1033 = vld [vmem:[#allocation2 + $0x18] sm:$0xff]
          %s1034 = scalar_lea.vmem [#allocation14], 128
          %v1035 = vld [vmem:[%s1034] sm:$0xff]
          %v1036 = vld [vmem:[%s1034 + $0x8] sm:$0xff]
          %v1037 = vld [vmem:[%s1034 + $0x10] sm:$0xff]
          %v1038 = vld [vmem:[%s1034 + $0x18] sm:$0xff]
          %v1039 = vld [vmem:[%s1034 + $0x20] sm:$0xff]
          %v1040 = vld [vmem:[%s1034 + $0x28] sm:$0xff]
          %v1041 = vld [vmem:[%s1034 + $0x30] sm:$0xff]
          %v1042 = vld [vmem:[%s1034 + $0x38] sm:$0xff]
          %v1043 = vld [vmem:[%s1034 + $0x40] sm:$0xff]
          %v1044 = vld [vmem:[%s1034 + $0x48] sm:$0xff]
          %v1045 = vld [vmem:[%s1034 + $0x50] sm:$0xff]
          %v1046 = vld [vmem:[%s1034 + $0x58] sm:$0xff]
          %v1047 = vld [vmem:[%s1034 + $0x60] sm:$0xff]
          %v1048 = vld [vmem:[%s1034 + $0x68] sm:$0xff]
          %v1049 = vld [vmem:[%s1034 + $0x70] sm:$0xff]
          %v1050 = vld [vmem:[%s1034 + $0x78] sm:$0xff]
          %1051 = vmatpush.msra.mxu0 %v1050
          %1052 = vmatpush.msra.mxu0 %v1049
          %1053 = vmatpush.msra.mxu0 %v1048
          %1054 = vmatpush.msra.mxu0 %v1047
          %1055 = vmatpush.msra.mxu0 %v1046
          %1056 = vmatpush.msra.mxu0 %v1045
          %1057 = vmatpush.msra.mxu0 %v1044
          %1058 = vmatpush.msra.mxu0 %v1043
          %1059 = vmatpush.msra.mxu0 %v1042
          %1060 = vmatpush.msra.mxu0 %v1041
          %1061 = vmatpush.msra.mxu0 %v1040
          %1062 = vmatpush.msra.mxu0 %v1039
          %1063 = vmatpush.msra.mxu0 %v1038
          %1064 = vmatpush.msra.mxu0 %v1037
          %1065 = vmatpush.msra.mxu0 %v1036
          %1066 = vmatpush.msra.mxu0 %v1035
          %1067 = vmatmul.f32.gmra.mxu0 %v1030
          %v1068 = vpop.f32.mrf.mxu0
          %v1069 = vadd.f32 0.0, %v1068
          %1070 = vmatmul.f32.gmra.mxu0 %v1031
          %v1071 = vpop.f32.mrf.mxu0
          %v1072 = vadd.f32 0.0, %v1071
          %1073 = vmatmul.f32.gmra.mxu0 %v1032
          %v1074 = vpop.f32.mrf.mxu0
          %v1075 = vadd.f32 0.0, %v1074
          %1076 = vmatmul.f32.gmra.mxu0 %v1033
          %v1077 = vpop.f32.mrf.mxu0
          %v1078 = vadd.f32 0.0, %v1077
          %1079 = vdwg.mxu0
          %s1080 = scalar_lea.vmem %s6, 1
          %v1081 = vld [vmem:[%s1080] sm:$0x1]
          %s1082 = scalar_lea.vmem %s7, 1
          %v1083 = vld [vmem:[%s1082] sm:$0x1]
          %v1084 = vmul.f32 %v1069, %v749
          %v1085 = vmul.f32 %v1072, %v750
          %v1086 = vmul.f32 %v1075, %v751
          %v1087 = vmul.f32 %v1078, %v752
          %v1088 = vadd.f32 %v1084, %v1085
          %v1089 = vadd.f32 %v1088, %v1086
          %v1090 = vadd.f32 %v1089, %v1087
          %v1091 = vrot.slane %v1090, 4
          %v1092 = vadd.f32 %v1090, %v1091
          %v1093 = vrot.slane %v1092, 2
          %v1094 = vadd.f32 %v1092, %v1093
          %v1095 = vrot.slane %v1094, 1
          %v1096 = vadd.f32 %v1094, %v1095
          %v1097 = vmul.f32 %v1084, %v1084
          %v1098 = vmul.f32 %v1085, %v1085
          %v1099 = vmul.f32 %v1086, %v1086
          %v1100 = vmul.f32 %v1087, %v1087
          %v1101 = vadd.f32 %v1097, %v1098
          %v1102 = vadd.f32 %v1101, %v1099
          %v1103 = vadd.f32 %v1102, %v1100
          %v1104 = vrot.slane %v1103, 4
          %v1105 = vadd.f32 %v1103, %v1104
          %v1106 = vrot.slane %v1105, 2
          %v1107 = vadd.f32 %v1105, %v1106
          %v1108 = vrot.slane %v1107, 1
          %v1109 = vadd.f32 %v1107, %v1108
          %v1110 = vmul.f32 %v1096, 0.041666668
          %v1111 = vmul.f32 %v1109, 0.041666668
          %v1112 = vmul.f32 %v1110, %v1110
          %v1113 = vsub.f32 %v1111, %v1112
          %v1114 = vmax.f32 %v1113, 0.0
          %v1115 = vadd.f32 %v1114, 1e-05
          %v1116 = vrsqrt.pop %v1115
          %v1117 = vmul.f32 %v1116, %v1115
          %v1118 = vmul.f32 %v1117, %v1116
          %v1119 = vmul.f32 0.5, %v1118
          %v1120 = vsub.f32 1.5, %v1119
          %v1121 = vmul.f32 %v1116, %v1120
          %vm1122 = vweird.f32 %v1115
          %vm1123 = vweird.f32 %v1116
          %vm1124 = vmor %vm1122, %vm1123
          %v1125 = vsel %vm1124, %v1116, %v1121
          %v1126 = vmul.f32 %v1081, %v1125
          %v1128 = vperm.slane %v1126, 0
          %v1130 = vmul.f32 %v1069, %v1128
          %v1131 = vmul.f32 %v1072, %v1128
          %v1132 = vmul.f32 %v1075, %v1128
          %v1133 = vmul.f32 %v1078, %v1128
          %v1134 = vmul.f32 %v1110, %v1126
          %v1135 = vsub.f32 %v1083, %v1134
          %v1137 = vperm.slane %v1135, 0
          %v1139 = vadd.f32 %v1130, %v1137
          %v1140 = vadd.f32 %v1131, %v1137
          %v1141 = vadd.f32 %v1132, %v1137
          %v1142 = vadd.f32 %v1133, %v1137
          %v1143 = vmax.f32 %v1139, 0.0
          %v1144 = vmax.f32 %v1140, 0.0
          %v1145 = vmax.f32 %v1141, 0.0
          %v1146 = vmax.f32 %v1142, 0.0
          %s1147 = scalar_lea.vmem [#allocation16], 128
          %v1148 = vld [vmem:[%s1147] sm:$0xff]
          %v1149 = vld [vmem:[%s1147 + $0x8] sm:$0xff]
          %v1150 = vld [vmem:[%s1147 + $0x10] sm:$0xff]
          %v1151 = vld [vmem:[%s1147 + $0x18] sm:$0xff]
          %v1152 = vld [vmem:[%s1147 + $0x20] sm:$0xff]
          %v1153 = vld [vmem:[%s1147 + $0x28] sm:$0xff]
          %v1154 = vld [vmem:[%s1147 + $0x30] sm:$0xff]
          %v1155 = vld [vmem:[%s1147 + $0x38] sm:$0xff]
          %v1156 = vld [vmem:[%s1147 + $0x40] sm:$0xff]
          %v1157 = vld [vmem:[%s1147 + $0x48] sm:$0xff]
          %v1158 = vld [vmem:[%s1147 + $0x50] sm:$0xff]
          %v1159 = vld [vmem:[%s1147 + $0x58] sm:$0xff]
          %v1160 = vld [vmem:[%s1147 + $0x60] sm:$0xff]
          %v1161 = vld [vmem:[%s1147 + $0x68] sm:$0xff]
          %v1162 = vld [vmem:[%s1147 + $0x70] sm:$0xff]
          %v1163 = vld [vmem:[%s1147 + $0x78] sm:$0xff]
          %1164 = vmatpush.msra.mxu0 %v1163
          %1165 = vmatpush.msra.mxu0 %v1162
          %1166 = vmatpush.msra.mxu0 %v1161
          %1167 = vmatpush.msra.mxu0 %v1160
          %1168 = vmatpush.msra.mxu0 %v1159
          %1169 = vmatpush.msra.mxu0 %v1158
          %1170 = vmatpush.msra.mxu0 %v1157
          %1171 = vmatpush.msra.mxu0 %v1156
          %1172 = vmatpush.msra.mxu0 %v1155
          %1173 = vmatpush.msra.mxu0 %v1154
          %1174 = vmatpush.msra.mxu0 %v1153
          %1175 = vmatpush.msra.mxu0 %v1152
          %1176 = vmatpush.msra.mxu0 %v1151
          %1177 = vmatpush.msra.mxu0 %v1150
          %1178 = vmatpush.msra.mxu0 %v1149
          %1179 = vmatpush.msra.mxu0 %v1148
          %1180 = vmatmul.f32.gmra.mxu0 %v1143
          %v1181 = vpop.f32.mrf.mxu0
          %v1182 = vadd.f32 0.0, %v1181
          %1183 = vmatmul.f32.gmra.mxu0 %v1144
          %v1184 = vpop.f32.mrf.mxu0
          %v1185 = vadd.f32 0.0, %v1184
          %1186 = vmatmul.f32.gmra.mxu0 %v1145
          %v1187 = vpop.f32.mrf.mxu0
          %v1188 = vadd.f32 0.0, %v1187
          %1189 = vmatmul.f32.gmra.mxu0 %v1146
          %v1190 = vpop.f32.mrf.mxu0
          %v1191 = vadd.f32 0.0, %v1190
          %1192 = vdwg.mxu0
          %s1193 = scalar_lea.vmem [#allocation17], 1
          %v1194 = vld [vmem:[%s1193] sm:$0x1]
          %s1195 = scalar_lea.vmem %s10, 1
          %v1196 = vld [vmem:[%s1195] sm:$0x1]
          %v1197 = vmul.f32 %v1182, %v749
          %v1198 = vmul.f32 %v1185, %v750
          %v1199 = vmul.f32 %v1188, %v751
          %v1200 = vmul.f32 %v1191, %v752
          %v1201 = vadd.f32 %v1197, %v1198
          %v1202 = vadd.f32 %v1201, %v1199
          %v1203 = vadd.f32 %v1202, %v1200
          %v1204 = vrot.slane %v1203, 4
          %v1205 = vadd.f32 %v1203, %v1204
          %v1206 = vrot.slane %v1205, 2
          %v1207 = vadd.f32 %v1205, %v1206
          %v1208 = vrot.slane %v1207, 1
          %v1209 = vadd.f32 %v1207, %v1208
          %v1210 = vmul.f32 %v1197, %v1197
          %v1211 = vmul.f32 %v1198, %v1198
          %v1212 = vmul.f32 %v1199, %v1199
          %v1213 = vmul.f32 %v1200, %v1200
          %v1214 = vadd.f32 %v1210, %v1211
          %v1215 = vadd.f32 %v1214, %v1212
          %v1216 = vadd.f32 %v1215, %v1213
          %v1217 = vrot.slane %v1216, 4
          %v1218 = vadd.f32 %v1216, %v1217
          %v1219 = vrot.slane %v1218, 2
          %v1220 = vadd.f32 %v1218, %v1219
          %v1221 = vrot.slane %v1220, 1
          %v1222 = vadd.f32 %v1220, %v1221
          %v1223 = vmul.f32 %v1209, 0.041666668
          %v1224 = vmul.f32 %v1222, 0.041666668
          %v1225 = vmul.f32 %v1223, %v1223
          %v1226 = vsub.f32 %v1224, %v1225
          %v1227 = vmax.f32 %v1226, 0.0
          %v1228 = vadd.f32 %v1227, 1e-05
          %v1229 = vrsqrt.pop %v1228
          %v1230 = vmul.f32 %v1229, %v1228
          %v1231 = vmul.f32 %v1230, %v1229
          %v1232 = vmul.f32 0.5, %v1231
          %v1233 = vsub.f32 1.5, %v1232
          %v1234 = vmul.f32 %v1229, %v1233
          %vm1235 = vweird.f32 %v1228
          %vm1236 = vweird.f32 %v1229
          %vm1237 = vmor %vm1235, %vm1236
          %v1238 = vsel %vm1237, %v1229, %v1234
          %v1239 = vmul.f32 %v1194, %v1238
          %v1241 = vperm.slane %v1239, 0
          %v1243 = vmul.f32 %v1182, %v1241
          %v1244 = vmul.f32 %v1185, %v1241
          %v1245 = vmul.f32 %v1188, %v1241
          %v1246 = vmul.f32 %v1191, %v1241
          %v1247 = vmul.f32 %v1223, %v1239
          %v1248 = vsub.f32 %v1196, %v1247
          %v1250 = vperm.slane %v1248, 0
          %v1252 = vadd.f32 %v1243, %v1250
          %v1253 = vadd.f32 %v1244, %v1250
          %v1254 = vadd.f32 %v1245, %v1250
          %v1255 = vadd.f32 %v1246, %v1250
          %v1256 = vadd.f32 %v1030, %v1252
          %v1257 = vadd.f32 %v1031, %v1253
          %v1258 = vadd.f32 %v1032, %v1254
          %v1259 = vadd.f32 %v1033, %v1255
          %v1260 = vmax.f32 %v1256, 0.0
          %v1261 = vmax.f32 %v1257, 0.0
          %v1262 = vmax.f32 %v1258, 0.0
          %v1263 = vmax.f32 %v1259, 0.0
          %1264 = vst [vmem:[#allocation2] sm:$0xff] %v1260
          %1265 = vst [vmem:[#allocation2 + $0x8] sm:$0xff] %v1261
          %1266 = vst [vmem:[#allocation2 + $0x10] sm:$0xff] %v1262
          %1267 = vst [vmem:[#allocation2 + $0x18] sm:$0xff] %v1263
          %v1268 = vld [vmem:[#allocation2] sm:$0xff]
          %v1269 = vld [vmem:[#allocation2 + $0x8] sm:$0xff]
          %v1270 = vld [vmem:[#allocation2 + $0x10] sm:$0xff]
          %v1271 = vld [vmem:[#allocation2 + $0x18] sm:$0xff]
          %s1272 = scalar_lea.vmem [#allocation14], 256
          %v1273 = vld [vmem:[%s1272] sm:$0xff]
          %v1274 = vld [vmem:[%s1272 + $0x8] sm:$0xff]
          %v1275 = vld [vmem:[%s1272 + $0x10] sm:$0xff]
          %v1276 = vld [vmem:[%s1272 + $0x18] sm:$0xff]
          %v1277 = vld [vmem:[%s1272 + $0x20] sm:$0xff]
          %v1278 = vld [vmem:[%s1272 + $0x28] sm:$0xff]
          %v1279 = vld [vmem:[%s1272 + $0x30] sm:$0xff]
          %v1280 = vld [vmem:[%s1272 + $0x38] sm:$0xff]
          %v1281 = vld [vmem:[%s1272 + $0x40] sm:$0xff]
          %v1282 = vld [vmem:[%s1272 + $0x48] sm:$0xff]
          %v1283 = vld [vmem:[%s1272 + $0x50] sm:$0xff]
          %v1284 = vld [vmem:[%s1272 + $0x58] sm:$0xff]
          %v1285 = vld [vmem:[%s1272 + $0x60] sm:$0xff]
          %v1286 = vld [vmem:[%s1272 + $0x68] sm:$0xff]
          %v1287 = vld [vmem:[%s1272 + $0x70] sm:$0xff]
          %v1288 = vld [vmem:[%s1272 + $0x78] sm:$0xff]
          %1289 = vmatpush.msra.mxu0 %v1288
          %1290 = vmatpush.msra.mxu0 %v1287
          %1291 = vmatpush.msra.mxu0 %v1286
          %1292 = vmatpush.msra.mxu0 %v1285
          %1293 = vmatpush.msra.mxu0 %v1284
          %1294 = vmatpush.msra.mxu0 %v1283
          %1295 = vmatpush.msra.mxu0 %v1282
          %1296 = vmatpush.msra.mxu0 %v1281
          %1297 = vmatpush.msra.mxu0 %v1280
          %1298 = vmatpush.msra.mxu0 %v1279
          %1299 = vmatpush.msra.mxu0 %v1278
          %1300 = vmatpush.msra.mxu0 %v1277
          %1301 = vmatpush.msra.mxu0 %v1276
          %1302 = vmatpush.msra.mxu0 %v1275
          %1303 = vmatpush.msra.mxu0 %v1274
          %1304 = vmatpush.msra.mxu0 %v1273
          %1305 = vmatmul.f32.gmra.mxu0 %v1268
          %v1306 = vpop.f32.mrf.mxu0
          %v1307 = vadd.f32 0.0, %v1306
          %1308 = vmatmul.f32.gmra.mxu0 %v1269
          %v1309 = vpop.f32.mrf.mxu0
          %v1310 = vadd.f32 0.0, %v1309
          %1311 = vmatmul.f32.gmra.mxu0 %v1270
          %v1312 = vpop.f32.mrf.mxu0
          %v1313 = vadd.f32 0.0, %v1312
          %1314 = vmatmul.f32.gmra.mxu0 %v1271
          %v1315 = vpop.f32.mrf.mxu0
          %v1316 = vadd.f32 0.0, %v1315
          %1317 = vdwg.mxu0
          %s1318 = scalar_lea.vmem %s6, 2
          %v1319 = vld [vmem:[%s1318] sm:$0x1]
          %s1320 = scalar_lea.vmem %s7, 2
          %v1321 = vld [vmem:[%s1320] sm:$0x1]
          %v1322 = vmul.f32 %v1307, %v749
          %v1323 = vmul.f32 %v1310, %v750
          %v1324 = vmul.f32 %v1313, %v751
          %v1325 = vmul.f32 %v1316, %v752
          %v1326 = vadd.f32 %v1322, %v1323
          %v1327 = vadd.f32 %v1326, %v1324
          %v1328 = vadd.f32 %v1327, %v1325
          %v1329 = vrot.slane %v1328, 4
          %v1330 = vadd.f32 %v1328, %v1329
          %v1331 = vrot.slane %v1330, 2
          %v1332 = vadd.f32 %v1330, %v1331
          %v1333 = vrot.slane %v1332, 1
          %v1334 = vadd.f32 %v1332, %v1333
          %v1335 = vmul.f32 %v1322, %v1322
          %v1336 = vmul.f32 %v1323, %v1323
          %v1337 = vmul.f32 %v1324, %v1324
          %v1338 = vmul.f32 %v1325, %v1325
          %v1339 = vadd.f32 %v1335, %v1336
          %v1340 = vadd.f32 %v1339, %v1337
          %v1341 = vadd.f32 %v1340, %v1338
          %v1342 = vrot.slane %v1341, 4
          %v1343 = vadd.f32 %v1341, %v1342
          %v1344 = vrot.slane %v1343, 2
          %v1345 = vadd.f32 %v1343, %v1344
          %v1346 = vrot.slane %v1345, 1
          %v1347 = vadd.f32 %v1345, %v1346
          %v1348 = vmul.f32 %v1334, 0.041666668
          %v1349 = vmul.f32 %v1347, 0.041666668
          %v1350 = vmul.f32 %v1348, %v1348
          %v1351 = vsub.f32 %v1349, %v1350
          %v1352 = vmax.f32 %v1351, 0.0
          %v1353 = vadd.f32 %v1352, 1e-05
          %v1354 = vrsqrt.pop %v1353
          %v1355 = vmul.f32 %v1354, %v1353
          %v1356 = vmul.f32 %v1355, %v1354
          %v1357 = vmul.f32 0.5, %v1356
          %v1358 = vsub.f32 1.5, %v1357
          %v1359 = vmul.f32 %v1354, %v1358
          %vm1360 = vweird.f32 %v1353
          %vm1361 = vweird.f32 %v1354
          %vm1362 = vmor %vm1360, %vm1361
          %v1363 = vsel %vm1362, %v1354, %v1359
          %v1364 = vmul.f32 %v1319, %v1363
          %v1366 = vperm.slane %v1364, 0
          %v1368 = vmul.f32 %v1307, %v1366
          %v1369 = vmul.f32 %v1310, %v1366
          %v1370 = vmul.f32 %v1313, %v1366
          %v1371 = vmul.f32 %v1316, %v1366
          %v1372 = vmul.f32 %v1348, %v1364
          %v1373 = vsub.f32 %v1321, %v1372
          %v1375 = vperm.slane %v1373, 0
          %v1377 = vadd.f32 %v1368, %v1375
          %v1378 = vadd.f32 %v1369, %v1375
          %v1379 = vadd.f32 %v1370, %v1375
          %v1380 = vadd.f32 %v1371, %v1375
          %v1381 = vmax.f32 %v1377, 0.0
          %v1382 = vmax.f32 %v1378, 0.0
          %v1383 = vmax.f32 %v1379, 0.0
          %v1384 = vmax.f32 %v1380, 0.0
          %s1385 = scalar_lea.vmem [#allocation16], 256
          %v1386 = vld [vmem:[%s1385] sm:$0xff]
          %v1387 = vld [vmem:[%s1385 + $0x8] sm:$0xff]
          %v1388 = vld [vmem:[%s1385 + $0x10] sm:$0xff]
          %v1389 = vld [vmem:[%s1385 + $0x18] sm:$0xff]
          %v1390 = vld [vmem:[%s1385 + $0x20] sm:$0xff]
          %v1391 = vld [vmem:[%s1385 + $0x28] sm:$0xff]
          %v1392 = vld [vmem:[%s1385 + $0x30] sm:$0xff]
          %v1393 = vld [vmem:[%s1385 + $0x38] sm:$0xff]
          %v1394 = vld [vmem:[%s1385 + $0x40] sm:$0xff]
          %v1395 = vld [vmem:[%s1385 + $0x48] sm:$0xff]
          %v1396 = vld [vmem:[%s1385 + $0x50] sm:$0xff]
          %v1397 = vld [vmem:[%s1385 + $0x58] sm:$0xff]
          %v1398 = vld [vmem:[%s1385 + $0x60] sm:$0xff]
          %v1399 = vld [vmem:[%s1385 + $0x68] sm:$0xff]
          %v1400 = vld [vmem:[%s1385 + $0x70] sm:$0xff]
          %v1401 = vld [vmem:[%s1385 + $0x78] sm:$0xff]
          %1402 = vmatpush.msra.mxu0 %v1401
          %1403 = vmatpush.msra.mxu0 %v1400
          %1404 = vmatpush.msra.mxu0 %v1399
          %1405 = vmatpush.msra.mxu0 %v1398
          %1406 = vmatpush.msra.mxu0 %v1397
          %1407 = vmatpush.msra.mxu0 %v1396
          %1408 = vmatpush.msra.mxu0 %v1395
          %1409 = vmatpush.msra.mxu0 %v1394
          %1410 = vmatpush.msra.mxu0 %v1393
          %1411 = vmatpush.msra.mxu0 %v1392
          %1412 = vmatpush.msra.mxu0 %v1391
          %1413 = vmatpush.msra.mxu0 %v1390
          %1414 = vmatpush.msra.mxu0 %v1389
          %1415 = vmatpush.msra.mxu0 %v1388
          %1416 = vmatpush.msra.mxu0 %v1387
          %1417 = vmatpush.msra.mxu0 %v1386
          %1418 = vmatmul.f32.gmra.mxu0 %v1381
          %v1419 = vpop.f32.mrf.mxu0
          %v1420 = vadd.f32 0.0, %v1419
          %1421 = vmatmul.f32.gmra.mxu0 %v1382
          %v1422 = vpop.f32.mrf.mxu0
          %v1423 = vadd.f32 0.0, %v1422
          %1424 = vmatmul.f32.gmra.mxu0 %v1383
          %v1425 = vpop.f32.mrf.mxu0
          %v1426 = vadd.f32 0.0, %v1425
          %1427 = vmatmul.f32.gmra.mxu0 %v1384
          %v1428 = vpop.f32.mrf.mxu0
          %v1429 = vadd.f32 0.0, %v1428
          %1430 = vdwg.mxu0
          %s1431 = scalar_lea.vmem [#allocation17], 2
          %v1432 = vld [vmem:[%s1431] sm:$0x1]
          %s1433 = scalar_lea.vmem %s10, 2
          %v1434 = vld [vmem:[%s1433] sm:$0x1]
          %v1435 = vmul.f32 %v1420, %v749
          %v1436 = vmul.f32 %v1423, %v750
          %v1437 = vmul.f32 %v1426, %v751
          %v1438 = vmul.f32 %v1429, %v752
          %v1439 = vadd.f32 %v1435, %v1436
          %v1440 = vadd.f32 %v1439, %v1437
          %v1441 = vadd.f32 %v1440, %v1438
          %v1442 = vrot.slane %v1441, 4
          %v1443 = vadd.f32 %v1441, %v1442
          %v1444 = vrot.slane %v1443, 2
          %v1445 = vadd.f32 %v1443, %v1444
          %v1446 = vrot.slane %v1445, 1
          %v1447 = vadd.f32 %v1445, %v1446
          %v1448 = vmul.f32 %v1435, %v1435
          %v1449 = vmul.f32 %v1436, %v1436
          %v1450 = vmul.f32 %v1437, %v1437
          %v1451 = vmul.f32 %v1438, %v1438
          %v1452 = vadd.f32 %v1448, %v1449
          %v1453 = vadd.f32 %v1452, %v1450
          %v1454 = vadd.f32 %v1453, %v1451
          %v1455 = vrot.slane %v1454, 4
          %v1456 = vadd.f32 %v1454, %v1455
          %v1457 = vrot.slane %v1456, 2
          %v1458 = vadd.f32 %v1456, %v1457
          %v1459 = vrot.slane %v1458, 1
          %v1460 = vadd.f32 %v1458, %v1459
          %v1461 = vmul.f32 %v1447, 0.041666668
          %v1462 = vmul.f32 %v1460, 0.041666668
          %v1463 = vmul.f32 %v1461, %v1461
          %v1464 = vsub.f32 %v1462, %v1463
          %v1465 = vmax.f32 %v1464, 0.0
          %v1466 = vadd.f32 %v1465, 1e-05
          %v1467 = vrsqrt.pop %v1466
          %v1468 = vmul.f32 %v1467, %v1466
          %v1469 = vmul.f32 %v1468, %v1467
          %v1470 = vmul.f32 0.5, %v1469
          %v1471 = vsub.f32 1.5, %v1470
          %v1472 = vmul.f32 %v1467, %v1471
          %vm1473 = vweird.f32 %v1466
          %vm1474 = vweird.f32 %v1467
          %vm1475 = vmor %vm1473, %vm1474
          %v1476 = vsel %vm1475, %v1467, %v1472
          %v1477 = vmul.f32 %v1432, %v1476
          %v1479 = vperm.slane %v1477, 0
          %v1481 = vmul.f32 %v1420, %v1479
          %v1482 = vmul.f32 %v1423, %v1479
          %v1483 = vmul.f32 %v1426, %v1479
          %v1484 = vmul.f32 %v1429, %v1479
          %v1485 = vmul.f32 %v1461, %v1477
          %v1486 = vsub.f32 %v1434, %v1485
          %v1488 = vperm.slane %v1486, 0
          %v1490 = vadd.f32 %v1481, %v1488
          %v1491 = vadd.f32 %v1482, %v1488
          %v1492 = vadd.f32 %v1483, %v1488
          %v1493 = vadd.f32 %v1484, %v1488
          %v1494 = vadd.f32 %v1268, %v1490
          %v1495 = vadd.f32 %v1269, %v1491
          %v1496 = vadd.f32 %v1270, %v1492
          %v1497 = vadd.f32 %v1271, %v1493
          %v1498 = vmax.f32 %v1494, 0.0
          %v1499 = vmax.f32 %v1495, 0.0
          %v1500 = vmax.f32 %v1496, 0.0
          %v1501 = vmax.f32 %v1497, 0.0
          %1502 = vst [vmem:[#allocation2] sm:$0xff] %v1498
          %1503 = vst [vmem:[#allocation2 + $0x8] sm:$0xff] %v1499
          %1504 = vst [vmem:[#allocation2 + $0x10] sm:$0xff] %v1500
          %1505 = vst [vmem:[#allocation2 + $0x18] sm:$0xff] %v1501
          %v1506 = vld [vmem:[#allocation2] sm:$0xff]
          %v1507 = vld [vmem:[#allocation2 + $0x8] sm:$0xff]
          %v1508 = vld [vmem:[#allocation2 + $0x10] sm:$0xff]
          %v1509 = vld [vmem:[#allocation2 + $0x18] sm:$0xff]
          %v1510 = vld [vmem:[#allocation19] sm:$0xff]
          %v1511 = vld [vmem:[#allocation19 + $0x8] sm:$0xff]
          %v1512 = vld [vmem:[#allocation19 + $0x10] sm:$0xff]
          %v1513 = vld [vmem:[#allocation19 + $0x18] sm:$0xff]
          %v1514 = vld [vmem:[#allocation19 + $0x20] sm:$0xff]
          %v1515 = vld [vmem:[#allocation19 + $0x28] sm:$0xff]
          %v1516 = vld [vmem:[#allocation19 + $0x30] sm:$0xff]
          %v1517 = vld [vmem:[#allocation19 + $0x38] sm:$0xff]
          %v1518 = vld [vmem:[#allocation19 + $0x40] sm:$0xff]
          %v1519 = vld [vmem:[#allocation19 + $0x48] sm:$0xff]
          %v1520 = vld [vmem:[#allocation19 + $0x50] sm:$0xff]
          %v1521 = vld [vmem:[#allocation19 + $0x58] sm:$0xff]
          %v1522 = vld [vmem:[#allocation19 + $0x60] sm:$0xff]
          %v1523 = vld [vmem:[#allocation19 + $0x68] sm:$0xff]
          %v1524 = vld [vmem:[#allocation19 + $0x70] sm:$0xff]
          %v1525 = vld [vmem:[#allocation19 + $0x78] sm:$0xff]
          %v1526 = vld [vmem:[%s12] sm:$0x1]
          %v1528 = vperm.slane %v1526, 0
          %1530 = vmatpush.msra.mxu0 %v1525
          %1531 = vmatpush.msra.mxu0 %v1524
          %1532 = vmatpush.msra.mxu0 %v1523
          %1533 = vmatpush.msra.mxu0 %v1522
          %1534 = vmatpush.msra.mxu0 %v1521
          %1535 = vmatpush.msra.mxu0 %v1520
          %1536 = vmatpush.msra.mxu0 %v1519
          %1537 = vmatpush.msra.mxu0 %v1518
          %1538 = vmatpush.msra.mxu0 %v1517
          %1539 = vmatpush.msra.mxu0 %v1516
          %1540 = vmatpush.msra.mxu0 %v1515
          %1541 = vmatpush.msra.mxu0 %v1514
          %1542 = vmatpush.msra.mxu0 %v1513
          %1543 = vmatpush.msra.mxu0 %v1512
          %1544 = vmatpush.msra.mxu0 %v1511
          %1545 = vmatpush.msra.mxu0 %v1510
          %1546 = vmatmul.f32.gmra.mxu0 %v1506
          %v1547 = vpop.f32.mrf.mxu0
          %v1548 = vadd.f32 %v1528, %v1547
          %1549 = vmatmul.f32.gmra.mxu0 %v1507
          %v1550 = vpop.f32.mrf.mxu0
          %v1551 = vadd.f32 %v1528, %v1550
          %1552 = vmatmul.f32.gmra.mxu0 %v1508
          %v1553 = vpop.f32.mrf.mxu0
          %v1554 = vadd.f32 %v1528, %v1553
          %1555 = vmatmul.f32.gmra.mxu0 %v1509
          %v1556 = vpop.f32.mrf.mxu0
          %v1557 = vadd.f32 %v1528, %v1556
          %1558 = vdwg.mxu0
          %v1559 = vmax.f32 %v1548, 0.0
          %v1560 = vmax.f32 %v1551, 0.0
          %v1561 = vmax.f32 %v1554, 0.0
          %v1562 = vmax.f32 %v1557, 0.0
          %v1563 = vld [vmem:[#allocation20] sm:$0xff]
          %v1564 = vld [vmem:[#allocation20 + $0x8] sm:$0xff]
          %v1565 = vld [vmem:[#allocation20 + $0x10] sm:$0xff]
          %v1566 = vld [vmem:[#allocation20 + $0x18] sm:$0xff]
          %v1567 = vld [vmem:[#allocation20 + $0x20] sm:$0xff]
          %v1568 = vld [vmem:[#allocation20 + $0x28] sm:$0xff]
          %v1569 = vld [vmem:[#allocation20 + $0x30] sm:$0xff]
          %v1570 = vld [vmem:[#allocation20 + $0x38] sm:$0xff]
          %v1571 = vld [vmem:[#allocation20 + $0x40] sm:$0xff]
          %v1572 = vld [vmem:[#allocation20 + $0x48] sm:$0xff]
          %v1573 = vld [vmem:[#allocation20 + $0x50] sm:$0xff]
          %v1574 = vld [vmem:[#allocation20 + $0x58] sm:$0xff]
          %v1575 = vld [vmem:[#allocation20 + $0x60] sm:$0xff]
          %v1576 = vld [vmem:[#allocation20 + $0x68] sm:$0xff]
          %v1577 = vld [vmem:[#allocation20 + $0x70] sm:$0xff]
          %v1578 = vld [vmem:[#allocation20 + $0x78] sm:$0xff]
          %v1579 = vld [vmem:[%s14] sm:$0x1]
          %v1581 = vperm.slane %v1579, 0
          %1583 = vmatpush.msra.mxu0 %v1578
          %1584 = vmatpush.msra.mxu0 %v1577
          %1585 = vmatpush.msra.mxu0 %v1576
          %1586 = vmatpush.msra.mxu0 %v1575
          %1587 = vmatpush.msra.mxu0 %v1574
          %1588 = vmatpush.msra.mxu0 %v1573
          %1589 = vmatpush.msra.mxu0 %v1572
          %1590 = vmatpush.msra.mxu0 %v1571
          %1591 = vmatpush.msra.mxu0 %v1570
          %1592 = vmatpush.msra.mxu0 %v1569
          %1593 = vmatpush.msra.mxu0 %v1568
          %1594 = vmatpush.msra.mxu0 %v1567
          %1595 = vmatpush.msra.mxu0 %v1566
          %1596 = vmatpush.msra.mxu0 %v1565
          %1597 = vmatpush.msra.mxu0 %v1564
          %1598 = vmatpush.msra.mxu0 %v1563
          %1599 = vmatmul.f32.gmra.mxu0 %v1559
          %v1600 = vpop.f32.mrf.mxu0
          %v1601 = vadd.f32 %v1581, %v1600
          %1602 = vmatmul.f32.gmra.mxu0 %v1560
          %v1603 = vpop.f32.mrf.mxu0
          %v1604 = vadd.f32 %v1581, %v1603
          %1605 = vmatmul.f32.gmra.mxu0 %v1561
          %v1606 = vpop.f32.mrf.mxu0
          %v1607 = vadd.f32 %v1581, %v1606
          %1608 = vmatmul.f32.gmra.mxu0 %v1562
          %v1609 = vpop.f32.mrf.mxu0
          %v1610 = vadd.f32 %v1581, %v1609
          %1611 = vdwg.mxu0
          %1612 = vst [vmem:[#allocation22] sm:$0xff] %v1601
          %1613 = vst [vmem:[#allocation22 + $0x8] sm:$0xff] %v1604
          %1614 = vst [vmem:[#allocation22 + $0x10] sm:$0xff] %v1607
          %1615 = vst [vmem:[#allocation22 + $0x18] sm:$0xff] %v1610
        $region128: #{tpu_custom_call.1} parent=79 // pred_fallthru
          _
        // Predicated region
        $region129: #{tpu_custom_call.1} parent=79 // pred_check
          %p1616 = pneg %p368
        $region130: #{tpu_custom_call.1} parent=79 // pred_check_branch
          %1618 = sbr.rel (%p1616) target = $region132
        $region131: #{tpu_custom_call.1} parent=79 // pred_region
          %1620 = vsyncadd [#allocation7], 0
          %s1621 = sshll.u32 [#allocation22], 4
          %s1622 = int_to_ptr.vmem [resolvable:$true] %s1621
          %s1623 = sshll.u32 %s15, 4
          %s1624 = int_to_ptr.hbm [resolvable:$true] %s1623
          %1629 = dma.vmem_to_hbm [thread:$0]  %s1622, 512, %s1624, [#allocation7], 128, 128, 8
        $region132: #{tpu_custom_call.1} parent=79 // pred_fallthru
          _
        // Predicated region
        $region133: #{tpu_custom_call.1} parent=79 // pred_check
          %p1630 = pneg %p368
        $region134: #{tpu_custom_call.1} parent=79 // pred_check_branch
          %1632 = sbr.rel (%p1630) target = $region136
        $region135: #{tpu_custom_call.1} parent=79 // pred_region
          %1634 = dma.done [#allocation7], 512
        $region136: #{tpu_custom_call.1} parent=79 // pred_fallthru
          _
      $region80: #{tpu_custom_call.1} parent=5 // pred_fallthru
        _
      %p1635 = scmp.le.s32.totalorder 2, %s30
      // Predicated region
      $region137: #{tpu_custom_call.1} parent=5 // pred_check
        %p1636 = pneg %p1635
      $region138: #{tpu_custom_call.1} parent=5 // pred_check_branch
        %1638 = sbr.rel (%p1636) target = $region140
      $region139: #{tpu_custom_call.1} parent=5 // pred_region
        %s1639 = ssub.s32 %s30, 2
      $region140: #{tpu_custom_call.1} parent=5 // pred_fallthru
        _
    $region6: #{tpu_custom_call.1} parent=1 // loop_footer
      %s34 = sadd.s32 1, %s30
    $region7: #{tpu_custom_call.1} parent=1 // loop_footer_branch
      %29 = sbr.rel target = $region3
    $region8: #{tpu_custom_call.1} parent=1 // loop_exit
      _
    %1640 = vsyncpa [#allocation6], 1
    %s1641 = scalar_lea.sflag [#allocation6], 1
    %1642 = vsyncpa %s1641, 1
    %1643 = vsyncpa [#allocation9], 1
    %1644 = vsyncpa [#allocation12], 1
    %1645 = vsyncpa [#allocation15], 1
    %1646 = vsyncpa [#allocation18], 1
    %1647 = vsyncpa [#allocation21], 1
    %1648 = vsyncpa [#allocation7], 1
    %s1649 = scalar_lea.sflag [#allocation7], 1
    %1650 = vsyncpa %s1649, 1

</llo_original>
